<compile_context>
chip_gen: v7x
topology: tpu7x:2x2x1
jax: 0.10.0
libtpu: 0.0.40
codegen_flags: <defaults>
</compile_context>

<pallas_src>
import jax
import jax.numpy as jnp
from jax.experimental import pallas as pl
from jax.experimental.pallas import tpu as pltpu

# Make the pure-JAX reference (and any in-kernel f32 matmul lowering) use full
# f32 precision so the correctness asserts are not at the mercy of the default
# bf16-pass matmul precision on TPU.
jax.config.update("jax_default_matmul_precision", "highest")

_DIMS = [(64, 64), (64, 8), (8, 8), (8, 10)]


def _round_up(n, m):
    return ((n + m - 1) // m) * m


def _make_kernel(mxu_dtype):
    def kernel(x_ref, w1_ref, b1_ref, w2_ref, b2_ref,
               w3_ref, b3_ref, w4_ref, b4_ref, o_ref):
        x = x_ref[...]
        w1 = w1_ref[...]
        if mxu_dtype is not None and x.dtype != mxu_dtype:
            # In-kernel VPU cast: free filler under the MXU, zero extra HBM
            # traffic (unlike a wrapper-side x.astype, which is a full extra
            # read+write pass over x in HBM).
            x = x.astype(mxu_dtype)
            w1 = w1.astype(mxu_dtype)
        # Layer 1: the only matmul with non-trivial K; f32 accumulation.
        h = jnp.dot(x, w1, preferred_element_type=jnp.float32)
        h = jnp.maximum(h + b1_ref[...], 0.0)
        # Layers 2..4: tiny matmuls; activations stay f32 inside the kernel.
        h = jnp.dot(h, w2_ref[...], preferred_element_type=jnp.float32)
        h = jnp.maximum(h + b2_ref[...], 0.0)
        h = jnp.dot(h, w3_ref[...], preferred_element_type=jnp.float32)
        h = jnp.maximum(h + b3_ref[...], 0.0)
        h = jnp.dot(h, w4_ref[...], preferred_element_type=jnp.float32)
        h = jnp.maximum(h + b4_ref[...], 0.0)  # spec ReLUs the output layer too
        o_ref[...] = h.astype(o_ref.dtype)
    return kernel


def net_forward(x, params, *, block_b=8192, mxu_dtype=None,
                out_dtype=jnp.float32):
    """x: (B, 64) f32 (or bf16); params: weights (in,out), biases (1,out).

    Returns (B, out_dtype). f32 in / f32 out is the default precision
    contract (matches the PyTorch reference). Set mxu_dtype=jnp.bfloat16
    and/or out_dtype=jnp.bfloat16 for bandwidth-optimized deployments.
    """
    B, d_in = x.shape
    assert d_in == 64, f"expected 64 input features, got {d_in}"

    w1, b1 = params["w1"], params["b1"]
    w2, b2 = params["w2"], params["b2"]
    w3, b3 = params["w3"], params["b3"]
    w4, b4 = params["w4"], params["b4"]

    # Batch tile: multiple of 8 (f32 sublanes); capped at round_up(ceil(B/2),8)
    # so the grid has >=2 steps whenever possible (v7x megacore), and at
    # block_b to bound VMEM. No padding of B: Pallas masks the ragged edge
    # block's stores; rows are independent so OOB reads in the last block are
    # harmless. (Do NOT add any cross-row reduction without re-padding.)
    tb = max(8, min(int(block_b), _round_up(pl.cdiv(B, 2), 8)))
    grid = (pl.cdiv(B, tb),)

    # Constant index_map => DMA'd once, resident in VMEM across all batch tiles.
    def resident(a):
        return pl.BlockSpec(a.shape, lambda i, _nd=a.ndim: (0,) * _nd)

    out_itemsize = jnp.dtype(out_dtype).itemsize
    weight_bytes = sum(int(a.size) * a.dtype.itemsize
                       for a in (w1, b1, w2, b2, w3, b3, w4, b4))
    flops = 2 * B * sum(fi * fo for fi, fo in _DIMS)
    bytes_accessed = (B * 64 * x.dtype.itemsize      # read x once
                      + B * 10 * out_itemsize        # write out once
                      + weight_bytes)                # weights once

    # Explicit VMEM budget: x double-buffered + lane-padded (10->128) out
    # double-buffered + f32 intermediate headroom + weights/misc. Clamped to
    # stay inside every generation's scoped limit at the default block_b.
    vmem_bytes = (2 * tb * 64 * x.dtype.itemsize
                  + 2 * tb * 128 * out_itemsize
                  + 4 * tb * 128 * 4
                  + (2 << 20))
    vmem_limit = int(max(16 << 20, min(vmem_bytes, 96 << 20)))

    out = pl.pallas_call(
        _make_kernel(mxu_dtype),
        out_shape=jax.ShapeDtypeStruct((B, 10), out_dtype),
        grid=grid,
        in_specs=[pl.BlockSpec((tb, 64), lambda i: (i, 0)),
                  resident(w1), resident(b1),
                  resident(w2), resident(b2),
                  resident(w3), resident(b3),
                  resident(w4), resident(b4)],
        out_specs=pl.BlockSpec((tb, 10), lambda i: (i, 0)),
        compiler_params=pltpu.CompilerParams(
            dimension_semantics=("parallel",),   # v7x: shard tiles over 2 TCs
            vmem_limit_bytes=vmem_limit),
        cost_estimate=pl.CostEstimate(
            flops=flops, transcendentals=0,
            bytes_accessed=int(bytes_accessed)),
    )(x, w1, b1, w2, b2, w3, b3, w4, b4)

    return out


def init_params(key):
    """Deterministic init mimicking torch.nn.Linear (uniform +/- 1/sqrt(fan_in)).
    Weights stored (in_features, out_features)."""
    params = {}
    keys = jax.random.split(key, 2 * len(_DIMS))
    for i, (fin, fout) in enumerate(_DIMS):
        bound = 1.0 / jnp.sqrt(float(fin))
        w = jax.random.uniform(keys[2 * i], (fin, fout), jnp.float32, -bound, bound)
        b = jax.random.uniform(keys[2 * i + 1], (1, fout), jnp.float32, -bound, bound)
        params[f"w{i + 1}"] = w
        params[f"b{i + 1}"] = b
    return params


def _reference(x, params):
    h = x
    for i in range(1, 5):
        h = jnp.maximum(h @ params[f"w{i}"] + params[f"b{i}"], 0.0)
    return h


if __name__ == "__main__":
    key = jax.random.PRNGKey(0)
    k_params, k_x = jax.random.split(key)
    params = init_params(k_params)

    # --- small-batch default (f32 in / f32 out): strict correctness --------
    B = 8
    x = jax.random.normal(k_x, (B, 64), jnp.float32)
    out = jax.block_until_ready(net_forward(x, params))
    ref = _reference(x, params)
    assert out.shape == (B, 10)
    assert jnp.allclose(out, ref, atol=1e-4, rtol=1e-4), \
        float(jnp.max(jnp.abs(out - ref)))

    # --- multi-tile ragged grid (grid=3, partial last block), f32 ----------
    B2 = 300
    x2 = jax.random.normal(jax.random.PRNGKey(1), (B2, 64), jnp.float32)
    out2 = jax.block_until_ready(net_forward(x2, params, block_b=128))
    ref2 = _reference(x2, params)
    assert out2.shape == (B2, 10)
    assert jnp.allclose(out2, ref2, atol=1e-4, rtol=1e-4), \
        float(jnp.max(jnp.abs(out2 - ref2)))

    # --- bandwidth-optimized options: in-kernel bf16 MXU cast + bf16 out ---
    out3 = jax.block_until_ready(
        net_forward(x2, params, block_b=128,
                    mxu_dtype=jnp.bfloat16, out_dtype=jnp.bfloat16))
    assert out3.shape == (B2, 10) and out3.dtype == jnp.bfloat16
    assert jnp.allclose(out3.astype(jnp.float32), ref2, atol=5e-2, rtol=5e-2)

    print("KERNEL_OK")
</pallas_src>

<mosaic_0001>
module attributes {stable_mosaic.version = 11 : i64} {
  func.func @kernel(%arg0: i32, %arg1: memref<8x64xf32, #tpu.memory_space<vmem>>, %arg2: memref<64x64xf32, #tpu.memory_space<vmem>>, %arg3: memref<1x64xf32, #tpu.memory_space<vmem>>, %arg4: memref<64x8xf32, #tpu.memory_space<vmem>>, %arg5: memref<1x8xf32, #tpu.memory_space<vmem>>, %arg6: memref<8x8xf32, #tpu.memory_space<vmem>>, %arg7: memref<1x8xf32, #tpu.memory_space<vmem>>, %arg8: memref<8x10xf32, #tpu.memory_space<vmem>>, %arg9: memref<1x10xf32, #tpu.memory_space<vmem>>, %arg10: memref<8x10xf32, #tpu.memory_space<vmem>>) attributes {dimension_semantics = [#tpu.dimension_semantics<parallel>], iteration_bounds = array<i64: 1>, scalar_prefetch = 0 : i64, scratch_operands = 0 : i64, tpu.core_type = #tpu.core_type<tc>, window_params = [{transform_indices = @transform_0, window_bounds = array<i64: 8, 64>}, {pipeline_mode = #tpu.pipeline_mode<synchronous>, transform_indices = @transform_1, window_bounds = array<i64: 64, 64>}, {pipeline_mode = #tpu.pipeline_mode<synchronous>, transform_indices = @transform_2, window_bounds = array<i64: 1, 64>}, {pipeline_mode = #tpu.pipeline_mode<synchronous>, transform_indices = @transform_3, window_bounds = array<i64: 64, 8>}, {pipeline_mode = #tpu.pipeline_mode<synchronous>, transform_indices = @transform_4, window_bounds = array<i64: 1, 8>}, {pipeline_mode = #tpu.pipeline_mode<synchronous>, transform_indices = @transform_5, window_bounds = array<i64: 8, 8>}, {pipeline_mode = #tpu.pipeline_mode<synchronous>, transform_indices = @transform_6, window_bounds = array<i64: 1, 8>}, {pipeline_mode = #tpu.pipeline_mode<synchronous>, transform_indices = @transform_7, window_bounds = array<i64: 8, 10>}, {pipeline_mode = #tpu.pipeline_mode<synchronous>, transform_indices = @transform_8, window_bounds = array<i64: 1, 10>}, {transform_indices = @transform_9, window_bounds = array<i64: 8, 10>}]} {
    %c0 = arith.constant 0 : index
    %c0_0 = arith.constant 0 : index
    %0 = vector.load %arg1[%c0, %c0_0] : memref<8x64xf32, #tpu.memory_space<vmem>>, vector<8x64xf32>
    %c0_1 = arith.constant 0 : index
    %c0_2 = arith.constant 0 : index
    %1 = vector.load %arg2[%c0_1, %c0_2] : memref<64x64xf32, #tpu.memory_space<vmem>>, vector<64x64xf32>
    %cst = arith.constant dense<0.000000e+00> : vector<8x64xf32>
    %2 = tpu.matmul %0, %1, %cst {dimension_numbers = #tpu.dot_dimension_numbers<[1], [0], [0], [1], [0, 0, 1, 1], [], []>, precision = #tpu.contract_precision<fp32>} : vector<8x64xf32>, vector<64x64xf32>, vector<8x64xf32> -> vector<8x64xf32>
    %c0_3 = arith.constant 0 : index
    %c0_4 = arith.constant 0 : index
    %3 = vector.load %arg3[%c0_3, %c0_4] : memref<1x64xf32, #tpu.memory_space<vmem>>, vector<1x64xf32>
    %4 = vector.broadcast %3 : vector<1x64xf32> to vector<8x64xf32>
    %5 = arith.addf %2, %4 : vector<8x64xf32>
    %cst_5 = arith.constant 0.000000e+00 : f32
    %6 = vector.broadcast %cst_5 : f32 to vector<8x64xf32>
    %7 = arith.maximumf %5, %6 : vector<8x64xf32>
    %c0_6 = arith.constant 0 : index
    %c0_7 = arith.constant 0 : index
    %8 = vector.load %arg4[%c0_6, %c0_7] : memref<64x8xf32, #tpu.memory_space<vmem>>, vector<64x8xf32>
    %cst_8 = arith.constant dense<0.000000e+00> : vector<8x8xf32>
    %9 = tpu.matmul %7, %8, %cst_8 {dimension_numbers = #tpu.dot_dimension_numbers<[1], [0], [0], [1], [0, 0, 1, 1], [], []>, precision = #tpu.contract_precision<fp32>} : vector<8x64xf32>, vector<64x8xf32>, vector<8x8xf32> -> vector<8x8xf32>
    %c0_9 = arith.constant 0 : index
    %c0_10 = arith.constant 0 : index
    %10 = vector.load %arg5[%c0_9, %c0_10] : memref<1x8xf32, #tpu.memory_space<vmem>>, vector<1x8xf32>
    %11 = vector.broadcast %10 : vector<1x8xf32> to vector<8x8xf32>
    %12 = arith.addf %9, %11 : vector<8x8xf32>
    %cst_11 = arith.constant 0.000000e+00 : f32
    %13 = vector.broadcast %cst_11 : f32 to vector<8x8xf32>
    %14 = arith.maximumf %12, %13 : vector<8x8xf32>
    %c0_12 = arith.constant 0 : index
    %c0_13 = arith.constant 0 : index
    %15 = vector.load %arg6[%c0_12, %c0_13] : memref<8x8xf32, #tpu.memory_space<vmem>>, vector<8x8xf32>
    %cst_14 = arith.constant dense<0.000000e+00> : vector<8x8xf32>
    %16 = tpu.matmul %14, %15, %cst_14 {dimension_numbers = #tpu.dot_dimension_numbers<[1], [0], [0], [1], [0, 0, 1, 1], [], []>, precision = #tpu.contract_precision<fp32>} : vector<8x8xf32>, vector<8x8xf32>, vector<8x8xf32> -> vector<8x8xf32>
    %c0_15 = arith.constant 0 : index
    %c0_16 = arith.constant 0 : index
    %17 = vector.load %arg7[%c0_15, %c0_16] : memref<1x8xf32, #tpu.memory_space<vmem>>, vector<1x8xf32>
    %18 = vector.broadcast %17 : vector<1x8xf32> to vector<8x8xf32>
    %19 = arith.addf %16, %18 : vector<8x8xf32>
    %cst_17 = arith.constant 0.000000e+00 : f32
    %20 = vector.broadcast %cst_17 : f32 to vector<8x8xf32>
    %21 = arith.maximumf %19, %20 : vector<8x8xf32>
    %c0_18 = arith.constant 0 : index
    %c0_19 = arith.constant 0 : index
    %22 = vector.load %arg8[%c0_18, %c0_19] : memref<8x10xf32, #tpu.memory_space<vmem>>, vector<8x10xf32>
    %cst_20 = arith.constant dense<0.000000e+00> : vector<8x10xf32>
    %23 = tpu.matmul %21, %22, %cst_20 {dimension_numbers = #tpu.dot_dimension_numbers<[1], [0], [0], [1], [0, 0, 1, 1], [], []>, precision = #tpu.contract_precision<fp32>} : vector<8x8xf32>, vector<8x10xf32>, vector<8x10xf32> -> vector<8x10xf32>
    %c0_21 = arith.constant 0 : index
    %c0_22 = arith.constant 0 : index
    %24 = vector.load %arg9[%c0_21, %c0_22] : memref<1x10xf32, #tpu.memory_space<vmem>>, vector<1x10xf32>
    %25 = vector.broadcast %24 : vector<1x10xf32> to vector<8x10xf32>
    %26 = arith.addf %23, %25 : vector<8x10xf32>
    %cst_23 = arith.constant 0.000000e+00 : f32
    %27 = vector.broadcast %cst_23 : f32 to vector<8x10xf32>
    %28 = arith.maximumf %26, %27 : vector<8x10xf32>
    %c0_24 = arith.constant 0 : index
    %c0_25 = arith.constant 0 : index
    %29 = vector.load %arg10[%c0_24, %c0_25] : memref<8x10xf32, #tpu.memory_space<vmem>>, vector<8x10xf32>
    tpu.vector_store %arg10[%c0_24, %c0_25], %28 {strides = array<i32>} : memref<8x10xf32, #tpu.memory_space<vmem>>, vector<8x10xf32>,
    return
  }
  func.func @transform_0(%arg0: i32) -> (i32, i32) {
    %c0_i32 = arith.constant 0 : i32
    %c0_i32_0 = arith.constant 0 : i32
    return %arg0, %c0_i32 : i32, i32
  }
  func.func @transform_1(%arg0: i32) -> (i32, i32) {
    %c0_i32 = arith.constant 0 : i32
    %c0_i32_0 = arith.constant 0 : i32
    %c0_i32_1 = arith.constant 0 : i32
    return %c0_i32, %c0_i32_0 : i32, i32
  }
  func.func @transform_2(%arg0: i32) -> (i32, i32) {
    %c0_i32 = arith.constant 0 : i32
    %c0_i32_0 = arith.constant 0 : i32
    %c0_i32_1 = arith.constant 0 : i32
    return %c0_i32, %c0_i32_0 : i32, i32
  }
  func.func @transform_3(%arg0: i32) -> (i32, i32) {
    %c0_i32 = arith.constant 0 : i32
    %c0_i32_0 = arith.constant 0 : i32
    %c0_i32_1 = arith.constant 0 : i32
    return %c0_i32, %c0_i32_0 : i32, i32
  }
  func.func @transform_4(%arg0: i32) -> (i32, i32) {
    %c0_i32 = arith.constant 0 : i32
    %c0_i32_0 = arith.constant 0 : i32
    %c0_i32_1 = arith.constant 0 : i32
    return %c0_i32, %c0_i32_0 : i32, i32
  }
  func.func @transform_5(%arg0: i32) -> (i32, i32) {
    %c0_i32 = arith.constant 0 : i32
    %c0_i32_0 = arith.constant 0 : i32
    %c0_i32_1 = arith.constant 0 : i32
    return %c0_i32, %c0_i32_0 : i32, i32
  }
  func.func @transform_6(%arg0: i32) -> (i32, i32) {
    %c0_i32 = arith.constant 0 : i32
    %c0_i32_0 = arith.constant 0 : i32
    %c0_i32_1 = arith.constant 0 : i32
    return %c0_i32, %c0_i32_0 : i32, i32
  }
  func.func @transform_7(%arg0: i32) -> (i32, i32) {
    %c0_i32 = arith.constant 0 : i32
    %c0_i32_0 = arith.constant 0 : i32
    %c0_i32_1 = arith.constant 0 : i32
    return %c0_i32, %c0_i32_0 : i32, i32
  }
  func.func @transform_8(%arg0: i32) -> (i32, i32) {
    %c0_i32 = arith.constant 0 : i32
    %c0_i32_0 = arith.constant 0 : i32
    %c0_i32_1 = arith.constant 0 : i32
    return %c0_i32, %c0_i32_0 : i32, i32
  }
  func.func @transform_9(%arg0: i32) -> (i32, i32) {
    %c0_i32 = arith.constant 0 : i32
    %c0_i32_0 = arith.constant 0 : i32
    return %arg0, %c0_i32 : i32, i32
  }
}

</mosaic_0001>

<llo_original>
// kernel: tpu_custom_call.1
$region0: #{tpu_custom_call.1}
  #allocation0 [shape = 'u32[]', space=smem, size = 0x4, offset = 0x4, fixed_abs, tag = 'smem constant byte address 0x4 - core index']
  #allocation1 [shape = 'u32[144,128]{1,0:T(1,128)}', space=vmem, size = 0x12000, scoped, tag = 'internal scratch']
  %s0 = inlined_call_operand.vmem [shape: f32[8,64], index: 0, kind: input, shape index: {}]
  %s1 = inlined_call_operand.vmem [shape: f32[64,64], index: 1, kind: input, shape index: {}]
  %s2 = inlined_call_operand.vmem [shape: f32[1,64], index: 2, kind: input, shape index: {}]
  %s3 = inlined_call_operand.vmem [shape: f32[64,8], index: 3, kind: input, shape index: {}]
  %s4 = inlined_call_operand.vmem [shape: f32[1,8], index: 4, kind: input, shape index: {}]
  %s5 = inlined_call_operand.vmem [shape: f32[8,8], index: 5, kind: input, shape index: {}]
  %s6 = inlined_call_operand.hbm [shape: f32[1,8], index: 6, kind: input, shape index: {}]
  %s7 = inlined_call_operand.vmem [shape: f32[8,10], index: 7, kind: input, shape index: {}]
  %s8 = inlined_call_operand.vmem [shape: f32[1,10], index: 8, kind: input, shape index: {}]
  %s9 = inlined_call_operand.hbm [shape: f32[8,10], index: 9, kind: output, shape index: {}]
  %s10 = sld [smem:[#allocation0]]
  $region50: #{tpu_custom_call.1} parent=0
    _
  %s12 = ssub.s32 1, %s10
  %s13 = scalar_select 0, %s12, %s10
  $region1: #{tpu_custom_call.1} parent=0
    #allocation2 [shape = 'u8[512]{0}', space=vmem, size = 0x400, scoped, tag = 'input window, operand 6, single buffered']
    #allocation3 [shape = 's32[1]{0}', space=sflag, size = 0x4, scoped, tag = 'scoped memory for tpu_custom_call.1']
    #allocation4 [shape = 's32[1]{0}', space=sflag, size = 0x4, scoped, tag = 'scoped memory for tpu_custom_call.1']
    #allocation5 [shape = 'u8[4096]{0}', space=vmem, size = 0x1000, scoped, tag = 'output window, operand 0, single buffered']
    %14 = vsyncpa [#allocation3], 0
    %15 = vsyncpa [#allocation4], 0
    // Predicated region
    $region2: #{tpu_custom_call.1} parent=1 // pred_check
      _
    $region3: #{tpu_custom_call.1} parent=1 // pred_check_branch
      %17 = sbr.rel (0) target = $region5
    $region4: #{tpu_custom_call.1} parent=1 // pred_region
      _
    $region5: #{tpu_custom_call.1} parent=1 // pred_fallthru
      _
    // Predicated region
    $region6: #{tpu_custom_call.1} parent=1 // pred_check
      _
    $region7: #{tpu_custom_call.1} parent=1 // pred_check_branch
      %19 = sbr.rel (0) target = $region9
    $region8: #{tpu_custom_call.1} parent=1 // pred_region
      _
    $region9: #{tpu_custom_call.1} parent=1 // pred_fallthru
      _
    // Predicated region
    $region10: #{tpu_custom_call.1} parent=1 // pred_check
      _
    $region11: #{tpu_custom_call.1} parent=1 // pred_check_branch
      %21 = sbr.rel (0) target = $region13
    $region12: #{tpu_custom_call.1} parent=1 // pred_region
      _
    $region13: #{tpu_custom_call.1} parent=1 // pred_fallthru
      _
    // Predicated region
    $region14: #{tpu_custom_call.1} parent=1 // pred_check
      _
    $region15: #{tpu_custom_call.1} parent=1 // pred_check_branch
      %23 = sbr.rel (0) target = $region17
    $region16: #{tpu_custom_call.1} parent=1 // pred_region
      _
    $region17: #{tpu_custom_call.1} parent=1 // pred_fallthru
      _
    // Predicated region
    $region18: #{tpu_custom_call.1} parent=1 // pred_check
      _
    $region19: #{tpu_custom_call.1} parent=1 // pred_check_branch
      %25 = sbr.rel (0) target = $region21
    $region20: #{tpu_custom_call.1} parent=1 // pred_region
      _
    $region21: #{tpu_custom_call.1} parent=1 // pred_fallthru
      _
    // Predicated region
    $region22: #{tpu_custom_call.1} parent=1 // pred_check
      _
    $region23: #{tpu_custom_call.1} parent=1 // pred_check_branch
      %27 = sbr.rel (0) target = $region25
    $region24: #{tpu_custom_call.1} parent=1 // pred_region
      _
    $region25: #{tpu_custom_call.1} parent=1 // pred_fallthru
      _
    // Predicated region
    $region26: #{tpu_custom_call.1} parent=1 // pred_check
      _
    $region27: #{tpu_custom_call.1} parent=1 // pred_check_branch
      %29 = sbr.rel (0) target = $region29
    $region28: #{tpu_custom_call.1} parent=1 // pred_region
      %s31 = ssub.s32 16, 16
      %32 = vsyncadd [#allocation3], %s31
      %s34 = sshll.u32 [#allocation2], 4
      %s35 = int_to_ptr.vmem [resolvable:$true] %s34
      %37 = dma.hbm_to_vmem [thread:$0]  %s6, 16, %s35, [#allocation3]
    $region29: #{tpu_custom_call.1} parent=1 // pred_fallthru
      _
    // Predicated region
    $region30: #{tpu_custom_call.1} parent=1 // pred_check
      _
    $region31: #{tpu_custom_call.1} parent=1 // pred_check_branch
      %39 = sbr.rel (0) target = $region33
    $region32: #{tpu_custom_call.1} parent=1 // pred_region
      _
    $region33: #{tpu_custom_call.1} parent=1 // pred_fallthru
      _
    // Predicated region
    $region34: #{tpu_custom_call.1} parent=1 // pred_check
      _
    $region35: #{tpu_custom_call.1} parent=1 // pred_check_branch
      %41 = sbr.rel (0) target = $region37
    $region36: #{tpu_custom_call.1} parent=1 // pred_region
      _
    $region37: #{tpu_custom_call.1} parent=1 // pred_fallthru
      _
    // Predicated region
    $region38: #{tpu_custom_call.1} parent=1 // pred_check
      _
    $region39: #{tpu_custom_call.1} parent=1 // pred_check_branch
      %43 = sbr.rel (0) target = $region41
    $region40: #{tpu_custom_call.1} parent=1 // pred_region
      %44 = dma.done [#allocation3], 16
    $region41: #{tpu_custom_call.1} parent=1 // pred_fallthru
      _
    %v45 = vld [vmem:[%s0] sm:$0xff]
    %v46 = vld [vmem:[%s1] sm:$0xff]
    %v47 = vld [vmem:[%s1 + $0x8] sm:$0xff]
    %v48 = vld [vmem:[%s1 + $0x10] sm:$0xff]
    %v49 = vld [vmem:[%s1 + $0x18] sm:$0xff]
    %v50 = vld [vmem:[%s1 + $0x20] sm:$0xff]
    %v51 = vld [vmem:[%s1 + $0x28] sm:$0xff]
    %v52 = vld [vmem:[%s1 + $0x30] sm:$0xff]
    %v53 = vld [vmem:[%s1 + $0x38] sm:$0xff]
    %v54 = vld [vmem:[%s2] sm:$0x1]
    %v56 = vlaneseq
    %v57 = vshrl.u32 %v56, 7
    %v58 = vsub.s32 0, %v57
    %v59 = vrot.slane %v54, %v58
    %vm61 = vcmask 523264
    %v63 = vsel %vm61, %v45, 0
    %65 = vmatprep.subr.mxu0 0.0
    %v66 = vand.u32 %v46, 4294901760
    %67 = vmatpush1.msra.mxu0 %v66
    %68 = vmatprep.subr.mxu0 0.0
    %v69 = vand.u32 %v47, 4294901760
    %70 = vmatpush1.msra.mxu0 %v69
    %71 = vmatprep.subr.mxu0 0.0
    %v72 = vand.u32 %v48, 4294901760
    %73 = vmatpush1.msra.mxu0 %v72
    %74 = vmatprep.subr.mxu0 0.0
    %v75 = vand.u32 %v49, 4294901760
    %76 = vmatpush1.msra.mxu0 %v75
    %77 = vmatprep.subr.mxu0 0.0
    %v78 = vand.u32 %v50, 4294901760
    %79 = vmatpush1.msra.mxu0 %v78
    %80 = vmatprep.subr.mxu0 0.0
    %v81 = vand.u32 %v51, 4294901760
    %82 = vmatpush1.msra.mxu0 %v81
    %83 = vmatprep.subr.mxu0 0.0
    %v84 = vand.u32 %v52, 4294901760
    %85 = vmatpush1.msra.mxu0 %v84
    %86 = vmatprep.subr.mxu0 0.0
    %v87 = vand.u32 %v53, 4294901760
    %88 = vmatpush1.msra.mxu0 %v87
    %89 = vmatprep.subr.mxu0 0.0
    %90 = vmatpush1.msra.mxu0 0.0
    %91 = vmatprep.subr.mxu0 0.0
    %92 = vmatpush1.msra.mxu0 0.0
    %93 = vmatprep.subr.mxu0 0.0
    %94 = vmatpush1.msra.mxu0 0.0
    %95 = vmatprep.subr.mxu0 0.0
    %96 = vmatpush1.msra.mxu0 0.0
    %97 = vmatprep.subr.mxu0 0.0
    %98 = vmatpush1.msra.mxu0 0.0
    %99 = vmatprep.subr.mxu0 0.0
    %100 = vmatpush1.msra.mxu0 0.0
    %101 = vmatprep.subr.mxu0 0.0
    %102 = vmatpush1.msra.mxu0 0.0
    %103 = vmatprep.subr.mxu0 0.0
    %104 = vmatpush1.msra.mxu0 0.0
    %105 = vmatprep.subr.mxu0 0.0
    %106 = vmatpush1.msra.mxu0 0.0
    %107 = vmatprep.subr.mxu0 0.0
    %108 = vmatpush1.msra.mxu0 0.0
    %109 = vmatprep.subr.mxu0 0.0
    %110 = vmatpush1.msra.mxu0 0.0
    %111 = vmatprep.subr.mxu0 0.0
    %112 = vmatpush1.msra.mxu0 0.0
    %113 = vmatprep.subr.mxu0 0.0
    %114 = vmatpush1.msra.mxu0 0.0
    %115 = vmatprep.subr.mxu0 0.0
    %116 = vmatpush1.msra.mxu0 0.0
    %117 = vmatprep.subr.mxu0 0.0
    %118 = vmatpush1.msra.mxu0 0.0
    %119 = vmatprep.subr.mxu0 0.0
    %120 = vmatpush1.msra.mxu0 0.0
    %121 = vmatprep.subr.mxu0 0.0
    %122 = vmatpush1.msra.mxu0 0.0
    %123 = vmatprep.subr.mxu0 0.0
    %124 = vmatpush1.msra.mxu0 0.0
    %125 = vmatprep.subr.mxu0 0.0
    %126 = vmatpush1.msra.mxu0 0.0
    %127 = vmatprep.subr.mxu0 0.0
    %128 = vmatpush1.msra.mxu0 0.0
    %129 = vmatprep.subr.mxu0 0.0
    %130 = vmatpush1.msra.mxu0 0.0
    %131 = vmatprep.subr.mxu0 0.0
    %132 = vmatpush1.msra.mxu0 0.0
    %133 = vmatprep.subr.mxu0 0.0
    %134 = vmatpush1.msra.mxu0 0.0
    %135 = vmatprep.subr.mxu0 0.0
    %136 = vmatpush1.msra.mxu0 0.0
    %137 = vmatprep.mubr.f32.mxu0 0.0
    %v138 = vand.u32 %v63, 4294901760
    %v139 = vsub.f32 %v63, %v138
    %v140 = vand.u32 %v139, 4294901760
    %v141 = vsub.f32 %v139, %v140
    %v142 = vand.u32 %v141, 4294901760
    %143 = vmatmul.mubr.f32.gmra.mrb[0].mxu0 %v142
    %v144 = vpop.f32.mrb[0].mxu0
    %v145 = vadd.f32 %v59, %v144
    %v146 = vpop.f32.mrb[0].mxu0
    %147 = vdwg.mxu0
    %148 = vmatprep.subr.mxu0 0.0
    %v149 = vand.u32 %v46, 4294901760
    %v150 = vsub.f32 %v46, %v149
    %v151 = vand.u32 %v150, 4294901760
    %v152 = vsub.f32 %v150, %v151
    %v153 = vand.u32 %v152, 4294901760
    %154 = vmatpush1.msra.mxu0 %v153
    %155 = vmatprep.subr.mxu0 0.0
    %v156 = vand.u32 %v47, 4294901760
    %v157 = vsub.f32 %v47, %v156
    %v158 = vand.u32 %v157, 4294901760
    %v159 = vsub.f32 %v157, %v158
    %v160 = vand.u32 %v159, 4294901760
    %161 = vmatpush1.msra.mxu0 %v160
    %162 = vmatprep.subr.mxu0 0.0
    %v163 = vand.u32 %v48, 4294901760
    %v164 = vsub.f32 %v48, %v163
    %v165 = vand.u32 %v164, 4294901760
    %v166 = vsub.f32 %v164, %v165
    %v167 = vand.u32 %v166, 4294901760
    %168 = vmatpush1.msra.mxu0 %v167
    %169 = vmatprep.subr.mxu0 0.0
    %v170 = vand.u32 %v49, 4294901760
    %v171 = vsub.f32 %v49, %v170
    %v172 = vand.u32 %v171, 4294901760
    %v173 = vsub.f32 %v171, %v172
    %v174 = vand.u32 %v173, 4294901760
    %175 = vmatpush1.msra.mxu0 %v174
    %176 = vmatprep.subr.mxu0 0.0
    %v177 = vand.u32 %v50, 4294901760
    %v178 = vsub.f32 %v50, %v177
    %v179 = vand.u32 %v178, 4294901760
    %v180 = vsub.f32 %v178, %v179
    %v181 = vand.u32 %v180, 4294901760
    %182 = vmatpush1.msra.mxu0 %v181
    %183 = vmatprep.subr.mxu0 0.0
    %v184 = vand.u32 %v51, 4294901760
    %v185 = vsub.f32 %v51, %v184
    %v186 = vand.u32 %v185, 4294901760
    %v187 = vsub.f32 %v185, %v186
    %v188 = vand.u32 %v187, 4294901760
    %189 = vmatpush1.msra.mxu0 %v188
    %190 = vmatprep.subr.mxu0 0.0
    %v191 = vand.u32 %v52, 4294901760
    %v192 = vsub.f32 %v52, %v191
    %v193 = vand.u32 %v192, 4294901760
    %v194 = vsub.f32 %v192, %v193
    %v195 = vand.u32 %v194, 4294901760
    %196 = vmatpush1.msra.mxu0 %v195
    %197 = vmatprep.subr.mxu0 0.0
    %v198 = vand.u32 %v53, 4294901760
    %v199 = vsub.f32 %v53, %v198
    %v200 = vand.u32 %v199, 4294901760
    %v201 = vsub.f32 %v199, %v200
    %v202 = vand.u32 %v201, 4294901760
    %203 = vmatpush1.msra.mxu0 %v202
    %204 = vmatprep.subr.mxu0 0.0
    %205 = vmatpush1.msra.mxu0 0.0
    %206 = vmatprep.subr.mxu0 0.0
    %207 = vmatpush1.msra.mxu0 0.0
    %208 = vmatprep.subr.mxu0 0.0
    %209 = vmatpush1.msra.mxu0 0.0
    %210 = vmatprep.subr.mxu0 0.0
    %211 = vmatpush1.msra.mxu0 0.0
    %212 = vmatprep.subr.mxu0 0.0
    %213 = vmatpush1.msra.mxu0 0.0
    %214 = vmatprep.subr.mxu0 0.0
    %215 = vmatpush1.msra.mxu0 0.0
    %216 = vmatprep.subr.mxu0 0.0
    %217 = vmatpush1.msra.mxu0 0.0
    %218 = vmatprep.subr.mxu0 0.0
    %219 = vmatpush1.msra.mxu0 0.0
    %220 = vmatprep.subr.mxu0 0.0
    %221 = vmatpush1.msra.mxu0 0.0
    %222 = vmatprep.subr.mxu0 0.0
    %223 = vmatpush1.msra.mxu0 0.0
    %224 = vmatprep.subr.mxu0 0.0
    %225 = vmatpush1.msra.mxu0 0.0
    %226 = vmatprep.subr.mxu0 0.0
    %227 = vmatpush1.msra.mxu0 0.0
    %228 = vmatprep.subr.mxu0 0.0
    %229 = vmatpush1.msra.mxu0 0.0
    %230 = vmatprep.subr.mxu0 0.0
    %231 = vmatpush1.msra.mxu0 0.0
    %232 = vmatprep.subr.mxu0 0.0
    %233 = vmatpush1.msra.mxu0 0.0
    %234 = vmatprep.subr.mxu0 0.0
    %235 = vmatpush1.msra.mxu0 0.0
    %236 = vmatprep.subr.mxu0 0.0
    %237 = vmatpush1.msra.mxu0 0.0
    %238 = vmatprep.subr.mxu0 0.0
    %239 = vmatpush1.msra.mxu0 0.0
    %240 = vmatprep.subr.mxu0 0.0
    %241 = vmatpush1.msra.mxu0 0.0
    %242 = vmatprep.subr.mxu0 0.0
    %243 = vmatpush1.msra.mxu0 0.0
    %244 = vmatprep.subr.mxu0 0.0
    %245 = vmatpush1.msra.mxu0 0.0
    %246 = vmatprep.subr.mxu0 0.0
    %247 = vmatpush1.msra.mxu0 0.0
    %248 = vmatprep.subr.mxu0 0.0
    %249 = vmatpush1.msra.mxu0 0.0
    %250 = vmatprep.subr.mxu0 0.0
    %251 = vmatpush1.msra.mxu0 0.0
    %252 = vmatprep.mubr.f32.mxu0 0.0
    %v253 = vand.u32 %v63, 4294901760
    %254 = vmatmul.mubr.f32.gmra.mrb[0].mxu0 %v253
    %v255 = vpop.f32.mrb[0].mxu0
    %v256 = vadd.f32 %v145, %v255
    %v257 = vpop.f32.mrb[0].mxu0
    %258 = vdwg.mxu0
    %259 = vmatprep.subr.mxu0 0.0
    %v260 = vand.u32 %v46, 4294901760
    %v261 = vsub.f32 %v46, %v260
    %262 = vmatpush1.msra.mxu0 %v261
    %263 = vmatprep.subr.mxu0 0.0
    %v264 = vand.u32 %v47, 4294901760
    %v265 = vsub.f32 %v47, %v264
    %266 = vmatpush1.msra.mxu0 %v265
    %267 = vmatprep.subr.mxu0 0.0
    %v268 = vand.u32 %v48, 4294901760
    %v269 = vsub.f32 %v48, %v268
    %270 = vmatpush1.msra.mxu0 %v269
    %271 = vmatprep.subr.mxu0 0.0
    %v272 = vand.u32 %v49, 4294901760
    %v273 = vsub.f32 %v49, %v272
    %274 = vmatpush1.msra.mxu0 %v273
    %275 = vmatprep.subr.mxu0 0.0
    %v276 = vand.u32 %v50, 4294901760
    %v277 = vsub.f32 %v50, %v276
    %278 = vmatpush1.msra.mxu0 %v277
    %279 = vmatprep.subr.mxu0 0.0
    %v280 = vand.u32 %v51, 4294901760
    %v281 = vsub.f32 %v51, %v280
    %282 = vmatpush1.msra.mxu0 %v281
    %283 = vmatprep.subr.mxu0 0.0
    %v284 = vand.u32 %v52, 4294901760
    %v285 = vsub.f32 %v52, %v284
    %286 = vmatpush1.msra.mxu0 %v285
    %287 = vmatprep.subr.mxu0 0.0
    %v288 = vand.u32 %v53, 4294901760
    %v289 = vsub.f32 %v53, %v288
    %290 = vmatpush1.msra.mxu0 %v289
    %291 = vmatprep.subr.mxu0 0.0
    %292 = vmatpush1.msra.mxu0 0.0
    %293 = vmatprep.subr.mxu0 0.0
    %294 = vmatpush1.msra.mxu0 0.0
    %295 = vmatprep.subr.mxu0 0.0
    %296 = vmatpush1.msra.mxu0 0.0
    %297 = vmatprep.subr.mxu0 0.0
    %298 = vmatpush1.msra.mxu0 0.0
    %299 = vmatprep.subr.mxu0 0.0
    %300 = vmatpush1.msra.mxu0 0.0
    %301 = vmatprep.subr.mxu0 0.0
    %302 = vmatpush1.msra.mxu0 0.0
    %303 = vmatprep.subr.mxu0 0.0
    %304 = vmatpush1.msra.mxu0 0.0
    %305 = vmatprep.subr.mxu0 0.0
    %306 = vmatpush1.msra.mxu0 0.0
    %307 = vmatprep.subr.mxu0 0.0
    %308 = vmatpush1.msra.mxu0 0.0
    %309 = vmatprep.subr.mxu0 0.0
    %310 = vmatpush1.msra.mxu0 0.0
    %311 = vmatprep.subr.mxu0 0.0
    %312 = vmatpush1.msra.mxu0 0.0
    %313 = vmatprep.subr.mxu0 0.0
    %314 = vmatpush1.msra.mxu0 0.0
    %315 = vmatprep.subr.mxu0 0.0
    %316 = vmatpush1.msra.mxu0 0.0
    %317 = vmatprep.subr.mxu0 0.0
    %318 = vmatpush1.msra.mxu0 0.0
    %319 = vmatprep.subr.mxu0 0.0
    %320 = vmatpush1.msra.mxu0 0.0
    %321 = vmatprep.subr.mxu0 0.0
    %322 = vmatpush1.msra.mxu0 0.0
    %323 = vmatprep.subr.mxu0 0.0
    %324 = vmatpush1.msra.mxu0 0.0
    %325 = vmatprep.subr.mxu0 0.0
    %326 = vmatpush1.msra.mxu0 0.0
    %327 = vmatprep.subr.mxu0 0.0
    %328 = vmatpush1.msra.mxu0 0.0
    %329 = vmatprep.subr.mxu0 0.0
    %330 = vmatpush1.msra.mxu0 0.0
    %331 = vmatprep.subr.mxu0 0.0
    %332 = vmatpush1.msra.mxu0 0.0
    %333 = vmatprep.subr.mxu0 0.0
    %334 = vmatpush1.msra.mxu0 0.0
    %335 = vmatprep.subr.mxu0 0.0
    %336 = vmatpush1.msra.mxu0 0.0
    %337 = vmatprep.subr.mxu0 0.0
    %338 = vmatpush1.msra.mxu0 0.0
    %339 = vmatprep.mubr.f32.mxu0 0.0
    %v340 = vand.u32 %v63, 4294901760
    %v341 = vsub.f32 %v63, %v340
    %342 = vmatmul.mubr.f32.gmra.mrb[0].mxu0 %v341
    %v343 = vpop.f32.mrb[0].mxu0
    %v344 = vadd.f32 %v256, %v343
    %v345 = vpop.f32.mrb[0].mxu0
    %346 = vdwg.mxu0
    %347 = vmatprep.subr.mxu0 0.0
    %v348 = vand.u32 %v46, 4294901760
    %349 = vmatpush1.msra.mxu0 %v348
    %350 = vmatprep.subr.mxu0 0.0
    %v351 = vand.u32 %v47, 4294901760
    %352 = vmatpush1.msra.mxu0 %v351
    %353 = vmatprep.subr.mxu0 0.0
    %v354 = vand.u32 %v48, 4294901760
    %355 = vmatpush1.msra.mxu0 %v354
    %356 = vmatprep.subr.mxu0 0.0
    %v357 = vand.u32 %v49, 4294901760
    %358 = vmatpush1.msra.mxu0 %v357
    %359 = vmatprep.subr.mxu0 0.0
    %v360 = vand.u32 %v50, 4294901760
    %361 = vmatpush1.msra.mxu0 %v360
    %362 = vmatprep.subr.mxu0 0.0
    %v363 = vand.u32 %v51, 4294901760
    %364 = vmatpush1.msra.mxu0 %v363
    %365 = vmatprep.subr.mxu0 0.0
    %v366 = vand.u32 %v52, 4294901760
    %367 = vmatpush1.msra.mxu0 %v366
    %368 = vmatprep.subr.mxu0 0.0
    %v369 = vand.u32 %v53, 4294901760
    %370 = vmatpush1.msra.mxu0 %v369
    %371 = vmatprep.subr.mxu0 0.0
    %372 = vmatpush1.msra.mxu0 0.0
    %373 = vmatprep.subr.mxu0 0.0
    %374 = vmatpush1.msra.mxu0 0.0
    %375 = vmatprep.subr.mxu0 0.0
    %376 = vmatpush1.msra.mxu0 0.0
    %377 = vmatprep.subr.mxu0 0.0
    %378 = vmatpush1.msra.mxu0 0.0
    %379 = vmatprep.subr.mxu0 0.0
    %380 = vmatpush1.msra.mxu0 0.0
    %381 = vmatprep.subr.mxu0 0.0
    %382 = vmatpush1.msra.mxu0 0.0
    %383 = vmatprep.subr.mxu0 0.0
    %384 = vmatpush1.msra.mxu0 0.0
    %385 = vmatprep.subr.mxu0 0.0
    %386 = vmatpush1.msra.mxu0 0.0
    %387 = vmatprep.subr.mxu0 0.0
    %388 = vmatpush1.msra.mxu0 0.0
    %389 = vmatprep.subr.mxu0 0.0
    %390 = vmatpush1.msra.mxu0 0.0
    %391 = vmatprep.subr.mxu0 0.0
    %392 = vmatpush1.msra.mxu0 0.0
    %393 = vmatprep.subr.mxu0 0.0
    %394 = vmatpush1.msra.mxu0 0.0
    %395 = vmatprep.subr.mxu0 0.0
    %396 = vmatpush1.msra.mxu0 0.0
    %397 = vmatprep.subr.mxu0 0.0
    %398 = vmatpush1.msra.mxu0 0.0
    %399 = vmatprep.subr.mxu0 0.0
    %400 = vmatpush1.msra.mxu0 0.0
    %401 = vmatprep.subr.mxu0 0.0
    %402 = vmatpush1.msra.mxu0 0.0
    %403 = vmatprep.subr.mxu0 0.0
    %404 = vmatpush1.msra.mxu0 0.0
    %405 = vmatprep.subr.mxu0 0.0
    %406 = vmatpush1.msra.mxu0 0.0
    %407 = vmatprep.subr.mxu0 0.0
    %408 = vmatpush1.msra.mxu0 0.0
    %409 = vmatprep.subr.mxu0 0.0
    %410 = vmatpush1.msra.mxu0 0.0
    %411 = vmatprep.subr.mxu0 0.0
    %412 = vmatpush1.msra.mxu0 0.0
    %413 = vmatprep.subr.mxu0 0.0
    %414 = vmatpush1.msra.mxu0 0.0
    %415 = vmatprep.subr.mxu0 0.0
    %416 = vmatpush1.msra.mxu0 0.0
    %417 = vmatprep.subr.mxu0 0.0
    %418 = vmatpush1.msra.mxu0 0.0
    %419 = vmatprep.mubr.f32.mxu0 0.0
    %v420 = vand.u32 %v63, 4294901760
    %v421 = vsub.f32 %v63, %v420
    %v422 = vand.u32 %v421, 4294901760
    %423 = vmatmul.mubr.f32.gmra.mrb[0].mxu0 %v422
    %v424 = vpop.f32.mrb[0].mxu0
    %v425 = vadd.f32 %v344, %v424
    %v426 = vpop.f32.mrb[0].mxu0
    %427 = vdwg.mxu0
    %428 = vmatprep.subr.mxu0 0.0
    %v429 = vand.u32 %v46, 4294901760
    %v430 = vsub.f32 %v46, %v429
    %v431 = vand.u32 %v430, 4294901760
    %432 = vmatpush1.msra.mxu0 %v431
    %433 = vmatprep.subr.mxu0 0.0
    %v434 = vand.u32 %v47, 4294901760
    %v435 = vsub.f32 %v47, %v434
    %v436 = vand.u32 %v435, 4294901760
    %437 = vmatpush1.msra.mxu0 %v436
    %438 = vmatprep.subr.mxu0 0.0
    %v439 = vand.u32 %v48, 4294901760
    %v440 = vsub.f32 %v48, %v439
    %v441 = vand.u32 %v440, 4294901760
    %442 = vmatpush1.msra.mxu0 %v441
    %443 = vmatprep.subr.mxu0 0.0
    %v444 = vand.u32 %v49, 4294901760
    %v445 = vsub.f32 %v49, %v444
    %v446 = vand.u32 %v445, 4294901760
    %447 = vmatpush1.msra.mxu0 %v446
    %448 = vmatprep.subr.mxu0 0.0
    %v449 = vand.u32 %v50, 4294901760
    %v450 = vsub.f32 %v50, %v449
    %v451 = vand.u32 %v450, 4294901760
    %452 = vmatpush1.msra.mxu0 %v451
    %453 = vmatprep.subr.mxu0 0.0
    %v454 = vand.u32 %v51, 4294901760
    %v455 = vsub.f32 %v51, %v454
    %v456 = vand.u32 %v455, 4294901760
    %457 = vmatpush1.msra.mxu0 %v456
    %458 = vmatprep.subr.mxu0 0.0
    %v459 = vand.u32 %v52, 4294901760
    %v460 = vsub.f32 %v52, %v459
    %v461 = vand.u32 %v460, 4294901760
    %462 = vmatpush1.msra.mxu0 %v461
    %463 = vmatprep.subr.mxu0 0.0
    %v464 = vand.u32 %v53, 4294901760
    %v465 = vsub.f32 %v53, %v464
    %v466 = vand.u32 %v465, 4294901760
    %467 = vmatpush1.msra.mxu0 %v466
    %468 = vmatprep.subr.mxu0 0.0
    %469 = vmatpush1.msra.mxu0 0.0
    %470 = vmatprep.subr.mxu0 0.0
    %471 = vmatpush1.msra.mxu0 0.0
    %472 = vmatprep.subr.mxu0 0.0
    %473 = vmatpush1.msra.mxu0 0.0
    %474 = vmatprep.subr.mxu0 0.0
    %475 = vmatpush1.msra.mxu0 0.0
    %476 = vmatprep.subr.mxu0 0.0
    %477 = vmatpush1.msra.mxu0 0.0
    %478 = vmatprep.subr.mxu0 0.0
    %479 = vmatpush1.msra.mxu0 0.0
    %480 = vmatprep.subr.mxu0 0.0
    %481 = vmatpush1.msra.mxu0 0.0
    %482 = vmatprep.subr.mxu0 0.0
    %483 = vmatpush1.msra.mxu0 0.0
    %484 = vmatprep.subr.mxu0 0.0
    %485 = vmatpush1.msra.mxu0 0.0
    %486 = vmatprep.subr.mxu0 0.0
    %487 = vmatpush1.msra.mxu0 0.0
    %488 = vmatprep.subr.mxu0 0.0
    %489 = vmatpush1.msra.mxu0 0.0
    %490 = vmatprep.subr.mxu0 0.0
    %491 = vmatpush1.msra.mxu0 0.0
    %492 = vmatprep.subr.mxu0 0.0
    %493 = vmatpush1.msra.mxu0 0.0
    %494 = vmatprep.subr.mxu0 0.0
    %495 = vmatpush1.msra.mxu0 0.0
    %496 = vmatprep.subr.mxu0 0.0
    %497 = vmatpush1.msra.mxu0 0.0
    %498 = vmatprep.subr.mxu0 0.0
    %499 = vmatpush1.msra.mxu0 0.0
    %500 = vmatprep.subr.mxu0 0.0
    %501 = vmatpush1.msra.mxu0 0.0
    %502 = vmatprep.subr.mxu0 0.0
    %503 = vmatpush1.msra.mxu0 0.0
    %504 = vmatprep.subr.mxu0 0.0
    %505 = vmatpush1.msra.mxu0 0.0
    %506 = vmatprep.subr.mxu0 0.0
    %507 = vmatpush1.msra.mxu0 0.0
    %508 = vmatprep.subr.mxu0 0.0
    %509 = vmatpush1.msra.mxu0 0.0
    %510 = vmatprep.subr.mxu0 0.0
    %511 = vmatpush1.msra.mxu0 0.0
    %512 = vmatprep.subr.mxu0 0.0
    %513 = vmatpush1.msra.mxu0 0.0
    %514 = vmatprep.subr.mxu0 0.0
    %515 = vmatpush1.msra.mxu0 0.0
    %516 = vmatprep.mubr.f32.mxu0 0.0
    %v517 = vand.u32 %v63, 4294901760
    %518 = vmatmul.mubr.f32.gmra.mrb[0].mxu0 %v517
    %v519 = vpop.f32.mrb[0].mxu0
    %v520 = vadd.f32 %v425, %v519
    %v521 = vpop.f32.mrb[0].mxu0
    %522 = vdwg.mxu0
    %523 = vmatprep.subr.mxu0 0.0
    %v524 = vand.u32 %v46, 4294901760
    %525 = vmatpush1.msra.mxu0 %v524
    %526 = vmatprep.subr.mxu0 0.0
    %v527 = vand.u32 %v47, 4294901760
    %528 = vmatpush1.msra.mxu0 %v527
    %529 = vmatprep.subr.mxu0 0.0
    %v530 = vand.u32 %v48, 4294901760
    %531 = vmatpush1.msra.mxu0 %v530
    %532 = vmatprep.subr.mxu0 0.0
    %v533 = vand.u32 %v49, 4294901760
    %534 = vmatpush1.msra.mxu0 %v533
    %535 = vmatprep.subr.mxu0 0.0
    %v536 = vand.u32 %v50, 4294901760
    %537 = vmatpush1.msra.mxu0 %v536
    %538 = vmatprep.subr.mxu0 0.0
    %v539 = vand.u32 %v51, 4294901760
    %540 = vmatpush1.msra.mxu0 %v539
    %541 = vmatprep.subr.mxu0 0.0
    %v542 = vand.u32 %v52, 4294901760
    %543 = vmatpush1.msra.mxu0 %v542
    %544 = vmatprep.subr.mxu0 0.0
    %v545 = vand.u32 %v53, 4294901760
    %546 = vmatpush1.msra.mxu0 %v545
    %547 = vmatprep.subr.mxu0 0.0
    %548 = vmatpush1.msra.mxu0 0.0
    %549 = vmatprep.subr.mxu0 0.0
    %550 = vmatpush1.msra.mxu0 0.0
    %551 = vmatprep.subr.mxu0 0.0
    %552 = vmatpush1.msra.mxu0 0.0
    %553 = vmatprep.subr.mxu0 0.0
    %554 = vmatpush1.msra.mxu0 0.0
    %555 = vmatprep.subr.mxu0 0.0
    %556 = vmatpush1.msra.mxu0 0.0
    %557 = vmatprep.subr.mxu0 0.0
    %558 = vmatpush1.msra.mxu0 0.0
    %559 = vmatprep.subr.mxu0 0.0
    %560 = vmatpush1.msra.mxu0 0.0
    %561 = vmatprep.subr.mxu0 0.0
    %562 = vmatpush1.msra.mxu0 0.0
    %563 = vmatprep.subr.mxu0 0.0
    %564 = vmatpush1.msra.mxu0 0.0
    %565 = vmatprep.subr.mxu0 0.0
    %566 = vmatpush1.msra.mxu0 0.0
    %567 = vmatprep.subr.mxu0 0.0
    %568 = vmatpush1.msra.mxu0 0.0
    %569 = vmatprep.subr.mxu0 0.0
    %570 = vmatpush1.msra.mxu0 0.0
    %571 = vmatprep.subr.mxu0 0.0
    %572 = vmatpush1.msra.mxu0 0.0
    %573 = vmatprep.subr.mxu0 0.0
    %574 = vmatpush1.msra.mxu0 0.0
    %575 = vmatprep.subr.mxu0 0.0
    %576 = vmatpush1.msra.mxu0 0.0
    %577 = vmatprep.subr.mxu0 0.0
    %578 = vmatpush1.msra.mxu0 0.0
    %579 = vmatprep.subr.mxu0 0.0
    %580 = vmatpush1.msra.mxu0 0.0
    %581 = vmatprep.subr.mxu0 0.0
    %582 = vmatpush1.msra.mxu0 0.0
    %583 = vmatprep.subr.mxu0 0.0
    %584 = vmatpush1.msra.mxu0 0.0
    %585 = vmatprep.subr.mxu0 0.0
    %586 = vmatpush1.msra.mxu0 0.0
    %587 = vmatprep.subr.mxu0 0.0
    %588 = vmatpush1.msra.mxu0 0.0
    %589 = vmatprep.subr.mxu0 0.0
    %590 = vmatpush1.msra.mxu0 0.0
    %591 = vmatprep.subr.mxu0 0.0
    %592 = vmatpush1.msra.mxu0 0.0
    %593 = vmatprep.subr.mxu0 0.0
    %594 = vmatpush1.msra.mxu0 0.0
    %595 = vmatprep.mubr.f32.mxu0 0.0
    %v596 = vand.u32 %v63, 4294901760
    %597 = vmatmul.mubr.f32.gmra.mrb[0].mxu0 %v596
    %v598 = vpop.f32.mrb[0].mxu0
    %v599 = vadd.f32 %v520, %v598
    %v600 = vpop.f32.mrb[0].mxu0
    %601 = vdwg.mxu0
    %v602 = vmax.f32 %v599, 0.0
    %v603 = vld [vmem:[%s3] sm:$0xff]
    %v604 = vld [vmem:[%s3 + $0x8] sm:$0xff]
    %v605 = vld [vmem:[%s3 + $0x10] sm:$0xff]
    %v606 = vld [vmem:[%s3 + $0x18] sm:$0xff]
    %v607 = vld [vmem:[%s3 + $0x20] sm:$0xff]
    %v608 = vld [vmem:[%s3 + $0x28] sm:$0xff]
    %v609 = vld [vmem:[%s3 + $0x30] sm:$0xff]
    %v610 = vld [vmem:[%s3 + $0x38] sm:$0xff]
    %v611 = vld [vmem:[%s4] sm:$0x1]
    %v613 = vlaneseq
    %v614 = vshrl.u32 %v613, 7
    %v615 = vsub.s32 0, %v614
    %v616 = vrot.slane %v611, %v615
    %v619 = vsel %vm61, %v602, 0
    %621 = vmatprep.subr.mxu0 0.0
    %v622 = vand.u32 %v603, 4294901760
    %623 = vmatpush1.msra.mxu0 %v622
    %624 = vmatprep.subr.mxu0 0.0
    %v625 = vand.u32 %v604, 4294901760
    %626 = vmatpush1.msra.mxu0 %v625
    %627 = vmatprep.subr.mxu0 0.0
    %v628 = vand.u32 %v605, 4294901760
    %629 = vmatpush1.msra.mxu0 %v628
    %630 = vmatprep.subr.mxu0 0.0
    %v631 = vand.u32 %v606, 4294901760
    %632 = vmatpush1.msra.mxu0 %v631
    %633 = vmatprep.subr.mxu0 0.0
    %v634 = vand.u32 %v607, 4294901760
    %635 = vmatpush1.msra.mxu0 %v634
    %636 = vmatprep.subr.mxu0 0.0
    %v637 = vand.u32 %v608, 4294901760
    %638 = vmatpush1.msra.mxu0 %v637
    %639 = vmatprep.subr.mxu0 0.0
    %v640 = vand.u32 %v609, 4294901760
    %641 = vmatpush1.msra.mxu0 %v640
    %642 = vmatprep.subr.mxu0 0.0
    %v643 = vand.u32 %v610, 4294901760
    %644 = vmatpush1.msra.mxu0 %v643
    %645 = vmatprep.subr.mxu0 0.0
    %646 = vmatpush1.msra.mxu0 0.0
    %647 = vmatprep.subr.mxu0 0.0
    %648 = vmatpush1.msra.mxu0 0.0
    %649 = vmatprep.subr.mxu0 0.0
    %650 = vmatpush1.msra.mxu0 0.0
    %651 = vmatprep.subr.mxu0 0.0
    %652 = vmatpush1.msra.mxu0 0.0
    %653 = vmatprep.subr.mxu0 0.0
    %654 = vmatpush1.msra.mxu0 0.0
    %655 = vmatprep.subr.mxu0 0.0
    %656 = vmatpush1.msra.mxu0 0.0
    %657 = vmatprep.subr.mxu0 0.0
    %658 = vmatpush1.msra.mxu0 0.0
    %659 = vmatprep.subr.mxu0 0.0
    %660 = vmatpush1.msra.mxu0 0.0
    %661 = vmatprep.subr.mxu0 0.0
    %662 = vmatpush1.msra.mxu0 0.0
    %663 = vmatprep.subr.mxu0 0.0
    %664 = vmatpush1.msra.mxu0 0.0
    %665 = vmatprep.subr.mxu0 0.0
    %666 = vmatpush1.msra.mxu0 0.0
    %667 = vmatprep.subr.mxu0 0.0
    %668 = vmatpush1.msra.mxu0 0.0
    %669 = vmatprep.subr.mxu0 0.0
    %670 = vmatpush1.msra.mxu0 0.0
    %671 = vmatprep.subr.mxu0 0.0
    %672 = vmatpush1.msra.mxu0 0.0
    %673 = vmatprep.subr.mxu0 0.0
    %674 = vmatpush1.msra.mxu0 0.0
    %675 = vmatprep.subr.mxu0 0.0
    %676 = vmatpush1.msra.mxu0 0.0
    %677 = vmatprep.subr.mxu0 0.0
    %678 = vmatpush1.msra.mxu0 0.0
    %679 = vmatprep.subr.mxu0 0.0
    %680 = vmatpush1.msra.mxu0 0.0
    %681 = vmatprep.subr.mxu0 0.0
    %682 = vmatpush1.msra.mxu0 0.0
    %683 = vmatprep.subr.mxu0 0.0
    %684 = vmatpush1.msra.mxu0 0.0
    %685 = vmatprep.subr.mxu0 0.0
    %686 = vmatpush1.msra.mxu0 0.0
    %687 = vmatprep.subr.mxu0 0.0
    %688 = vmatpush1.msra.mxu0 0.0
    %689 = vmatprep.subr.mxu0 0.0
    %690 = vmatpush1.msra.mxu0 0.0
    %691 = vmatprep.subr.mxu0 0.0
    %692 = vmatpush1.msra.mxu0 0.0
    %693 = vmatprep.mubr.f32.mxu0 0.0
    %v694 = vand.u32 %v619, 4294901760
    %v695 = vsub.f32 %v619, %v694
    %v696 = vand.u32 %v695, 4294901760
    %v697 = vsub.f32 %v695, %v696
    %v698 = vand.u32 %v697, 4294901760
    %699 = vmatmul.mubr.f32.gmra.mrb[0].mxu0 %v698
    %v700 = vpop.f32.mrb[0].mxu0
    %v701 = vadd.f32 %v616, %v700
    %v702 = vpop.f32.mrb[0].mxu0
    %703 = vdwg.mxu0
    %704 = vmatprep.subr.mxu0 0.0
    %v705 = vand.u32 %v603, 4294901760
    %v706 = vsub.f32 %v603, %v705
    %v707 = vand.u32 %v706, 4294901760
    %v708 = vsub.f32 %v706, %v707
    %v709 = vand.u32 %v708, 4294901760
    %710 = vmatpush1.msra.mxu0 %v709
    %711 = vmatprep.subr.mxu0 0.0
    %v712 = vand.u32 %v604, 4294901760
    %v713 = vsub.f32 %v604, %v712
    %v714 = vand.u32 %v713, 4294901760
    %v715 = vsub.f32 %v713, %v714
    %v716 = vand.u32 %v715, 4294901760
    %717 = vmatpush1.msra.mxu0 %v716
    %718 = vmatprep.subr.mxu0 0.0
    %v719 = vand.u32 %v605, 4294901760
    %v720 = vsub.f32 %v605, %v719
    %v721 = vand.u32 %v720, 4294901760
    %v722 = vsub.f32 %v720, %v721
    %v723 = vand.u32 %v722, 4294901760
    %724 = vmatpush1.msra.mxu0 %v723
    %725 = vmatprep.subr.mxu0 0.0
    %v726 = vand.u32 %v606, 4294901760
    %v727 = vsub.f32 %v606, %v726
    %v728 = vand.u32 %v727, 4294901760
    %v729 = vsub.f32 %v727, %v728
    %v730 = vand.u32 %v729, 4294901760
    %731 = vmatpush1.msra.mxu0 %v730
    %732 = vmatprep.subr.mxu0 0.0
    %v733 = vand.u32 %v607, 4294901760
    %v734 = vsub.f32 %v607, %v733
    %v735 = vand.u32 %v734, 4294901760
    %v736 = vsub.f32 %v734, %v735
    %v737 = vand.u32 %v736, 4294901760
    %738 = vmatpush1.msra.mxu0 %v737
    %739 = vmatprep.subr.mxu0 0.0
    %v740 = vand.u32 %v608, 4294901760
    %v741 = vsub.f32 %v608, %v740
    %v742 = vand.u32 %v741, 4294901760
    %v743 = vsub.f32 %v741, %v742
    %v744 = vand.u32 %v743, 4294901760
    %745 = vmatpush1.msra.mxu0 %v744
    %746 = vmatprep.subr.mxu0 0.0
    %v747 = vand.u32 %v609, 4294901760
    %v748 = vsub.f32 %v609, %v747
    %v749 = vand.u32 %v748, 4294901760
    %v750 = vsub.f32 %v748, %v749
    %v751 = vand.u32 %v750, 4294901760
    %752 = vmatpush1.msra.mxu0 %v751
    %753 = vmatprep.subr.mxu0 0.0
    %v754 = vand.u32 %v610, 4294901760
    %v755 = vsub.f32 %v610, %v754
    %v756 = vand.u32 %v755, 4294901760
    %v757 = vsub.f32 %v755, %v756
    %v758 = vand.u32 %v757, 4294901760
    %759 = vmatpush1.msra.mxu0 %v758
    %760 = vmatprep.subr.mxu0 0.0
    %761 = vmatpush1.msra.mxu0 0.0
    %762 = vmatprep.subr.mxu0 0.0
    %763 = vmatpush1.msra.mxu0 0.0
    %764 = vmatprep.subr.mxu0 0.0
    %765 = vmatpush1.msra.mxu0 0.0
    %766 = vmatprep.subr.mxu0 0.0
    %767 = vmatpush1.msra.mxu0 0.0
    %768 = vmatprep.subr.mxu0 0.0
    %769 = vmatpush1.msra.mxu0 0.0
    %770 = vmatprep.subr.mxu0 0.0
    %771 = vmatpush1.msra.mxu0 0.0
    %772 = vmatprep.subr.mxu0 0.0
    %773 = vmatpush1.msra.mxu0 0.0
    %774 = vmatprep.subr.mxu0 0.0
    %775 = vmatpush1.msra.mxu0 0.0
    %776 = vmatprep.subr.mxu0 0.0
    %777 = vmatpush1.msra.mxu0 0.0
    %778 = vmatprep.subr.mxu0 0.0
    %779 = vmatpush1.msra.mxu0 0.0
    %780 = vmatprep.subr.mxu0 0.0
    %781 = vmatpush1.msra.mxu0 0.0
    %782 = vmatprep.subr.mxu0 0.0
    %783 = vmatpush1.msra.mxu0 0.0
    %784 = vmatprep.subr.mxu0 0.0
    %785 = vmatpush1.msra.mxu0 0.0
    %786 = vmatprep.subr.mxu0 0.0
    %787 = vmatpush1.msra.mxu0 0.0
    %788 = vmatprep.subr.mxu0 0.0
    %789 = vmatpush1.msra.mxu0 0.0
    %790 = vmatprep.subr.mxu0 0.0
    %791 = vmatpush1.msra.mxu0 0.0
    %792 = vmatprep.subr.mxu0 0.0
    %793 = vmatpush1.msra.mxu0 0.0
    %794 = vmatprep.subr.mxu0 0.0
    %795 = vmatpush1.msra.mxu0 0.0
    %796 = vmatprep.subr.mxu0 0.0
    %797 = vmatpush1.msra.mxu0 0.0
    %798 = vmatprep.subr.mxu0 0.0
    %799 = vmatpush1.msra.mxu0 0.0
    %800 = vmatprep.subr.mxu0 0.0
    %801 = vmatpush1.msra.mxu0 0.0
    %802 = vmatprep.subr.mxu0 0.0
    %803 = vmatpush1.msra.mxu0 0.0
    %804 = vmatprep.subr.mxu0 0.0
    %805 = vmatpush1.msra.mxu0 0.0
    %806 = vmatprep.subr.mxu0 0.0
    %807 = vmatpush1.msra.mxu0 0.0
    %808 = vmatprep.mubr.f32.mxu0 0.0
    %v809 = vand.u32 %v619, 4294901760
    %810 = vmatmul.mubr.f32.gmra.mrb[0].mxu0 %v809
    %v811 = vpop.f32.mrb[0].mxu0
    %v812 = vadd.f32 %v701, %v811
    %v813 = vpop.f32.mrb[0].mxu0
    %814 = vdwg.mxu0
    %815 = vmatprep.subr.mxu0 0.0
    %v816 = vand.u32 %v603, 4294901760
    %v817 = vsub.f32 %v603, %v816
    %818 = vmatpush1.msra.mxu0 %v817
    %819 = vmatprep.subr.mxu0 0.0
    %v820 = vand.u32 %v604, 4294901760
    %v821 = vsub.f32 %v604, %v820
    %822 = vmatpush1.msra.mxu0 %v821
    %823 = vmatprep.subr.mxu0 0.0
    %v824 = vand.u32 %v605, 4294901760
    %v825 = vsub.f32 %v605, %v824
    %826 = vmatpush1.msra.mxu0 %v825
    %827 = vmatprep.subr.mxu0 0.0
    %v828 = vand.u32 %v606, 4294901760
    %v829 = vsub.f32 %v606, %v828
    %830 = vmatpush1.msra.mxu0 %v829
    %831 = vmatprep.subr.mxu0 0.0
    %v832 = vand.u32 %v607, 4294901760
    %v833 = vsub.f32 %v607, %v832
    %834 = vmatpush1.msra.mxu0 %v833
    %835 = vmatprep.subr.mxu0 0.0
    %v836 = vand.u32 %v608, 4294901760
    %v837 = vsub.f32 %v608, %v836
    %838 = vmatpush1.msra.mxu0 %v837
    %839 = vmatprep.subr.mxu0 0.0
    %v840 = vand.u32 %v609, 4294901760
    %v841 = vsub.f32 %v609, %v840
    %842 = vmatpush1.msra.mxu0 %v841
    %843 = vmatprep.subr.mxu0 0.0
    %v844 = vand.u32 %v610, 4294901760
    %v845 = vsub.f32 %v610, %v844
    %846 = vmatpush1.msra.mxu0 %v845
    %847 = vmatprep.subr.mxu0 0.0
    %848 = vmatpush1.msra.mxu0 0.0
    %849 = vmatprep.subr.mxu0 0.0
    %850 = vmatpush1.msra.mxu0 0.0
    %851 = vmatprep.subr.mxu0 0.0
    %852 = vmatpush1.msra.mxu0 0.0
    %853 = vmatprep.subr.mxu0 0.0
    %854 = vmatpush1.msra.mxu0 0.0
    %855 = vmatprep.subr.mxu0 0.0
    %856 = vmatpush1.msra.mxu0 0.0
    %857 = vmatprep.subr.mxu0 0.0
    %858 = vmatpush1.msra.mxu0 0.0
    %859 = vmatprep.subr.mxu0 0.0
    %860 = vmatpush1.msra.mxu0 0.0
    %861 = vmatprep.subr.mxu0 0.0
    %862 = vmatpush1.msra.mxu0 0.0
    %863 = vmatprep.subr.mxu0 0.0
    %864 = vmatpush1.msra.mxu0 0.0
    %865 = vmatprep.subr.mxu0 0.0
    %866 = vmatpush1.msra.mxu0 0.0
    %867 = vmatprep.subr.mxu0 0.0
    %868 = vmatpush1.msra.mxu0 0.0
    %869 = vmatprep.subr.mxu0 0.0
    %870 = vmatpush1.msra.mxu0 0.0
    %871 = vmatprep.subr.mxu0 0.0
    %872 = vmatpush1.msra.mxu0 0.0
    %873 = vmatprep.subr.mxu0 0.0
    %874 = vmatpush1.msra.mxu0 0.0
    %875 = vmatprep.subr.mxu0 0.0
    %876 = vmatpush1.msra.mxu0 0.0
    %877 = vmatprep.subr.mxu0 0.0
    %878 = vmatpush1.msra.mxu0 0.0
    %879 = vmatprep.subr.mxu0 0.0
    %880 = vmatpush1.msra.mxu0 0.0
    %881 = vmatprep.subr.mxu0 0.0
    %882 = vmatpush1.msra.mxu0 0.0
    %883 = vmatprep.subr.mxu0 0.0
    %884 = vmatpush1.msra.mxu0 0.0
    %885 = vmatprep.subr.mxu0 0.0
    %886 = vmatpush1.msra.mxu0 0.0
    %887 = vmatprep.subr.mxu0 0.0
    %888 = vmatpush1.msra.mxu0 0.0
    %889 = vmatprep.subr.mxu0 0.0
    %890 = vmatpush1.msra.mxu0 0.0
    %891 = vmatprep.subr.mxu0 0.0
    %892 = vmatpush1.msra.mxu0 0.0
    %893 = vmatprep.subr.mxu0 0.0
    %894 = vmatpush1.msra.mxu0 0.0
    %895 = vmatprep.mubr.f32.mxu0 0.0
    %v896 = vand.u32 %v619, 4294901760
    %v897 = vsub.f32 %v619, %v896
    %898 = vmatmul.mubr.f32.gmra.mrb[0].mxu0 %v897
    %v899 = vpop.f32.mrb[0].mxu0
    %v900 = vadd.f32 %v812, %v899
    %v901 = vpop.f32.mrb[0].mxu0
    %902 = vdwg.mxu0
    %903 = vmatprep.subr.mxu0 0.0
    %v904 = vand.u32 %v603, 4294901760
    %905 = vmatpush1.msra.mxu0 %v904
    %906 = vmatprep.subr.mxu0 0.0
    %v907 = vand.u32 %v604, 4294901760
    %908 = vmatpush1.msra.mxu0 %v907
    %909 = vmatprep.subr.mxu0 0.0
    %v910 = vand.u32 %v605, 4294901760
    %911 = vmatpush1.msra.mxu0 %v910
    %912 = vmatprep.subr.mxu0 0.0
    %v913 = vand.u32 %v606, 4294901760
    %914 = vmatpush1.msra.mxu0 %v913
    %915 = vmatprep.subr.mxu0 0.0
    %v916 = vand.u32 %v607, 4294901760
    %917 = vmatpush1.msra.mxu0 %v916
    %918 = vmatprep.subr.mxu0 0.0
    %v919 = vand.u32 %v608, 4294901760
    %920 = vmatpush1.msra.mxu0 %v919
    %921 = vmatprep.subr.mxu0 0.0
    %v922 = vand.u32 %v609, 4294901760
    %923 = vmatpush1.msra.mxu0 %v922
    %924 = vmatprep.subr.mxu0 0.0
    %v925 = vand.u32 %v610, 4294901760
    %926 = vmatpush1.msra.mxu0 %v925
    %927 = vmatprep.subr.mxu0 0.0
    %928 = vmatpush1.msra.mxu0 0.0
    %929 = vmatprep.subr.mxu0 0.0
    %930 = vmatpush1.msra.mxu0 0.0
    %931 = vmatprep.subr.mxu0 0.0
    %932 = vmatpush1.msra.mxu0 0.0
    %933 = vmatprep.subr.mxu0 0.0
    %934 = vmatpush1.msra.mxu0 0.0
    %935 = vmatprep.subr.mxu0 0.0
    %936 = vmatpush1.msra.mxu0 0.0
    %937 = vmatprep.subr.mxu0 0.0
    %938 = vmatpush1.msra.mxu0 0.0
    %939 = vmatprep.subr.mxu0 0.0
    %940 = vmatpush1.msra.mxu0 0.0
    %941 = vmatprep.subr.mxu0 0.0
    %942 = vmatpush1.msra.mxu0 0.0
    %943 = vmatprep.subr.mxu0 0.0
    %944 = vmatpush1.msra.mxu0 0.0
    %945 = vmatprep.subr.mxu0 0.0
    %946 = vmatpush1.msra.mxu0 0.0
    %947 = vmatprep.subr.mxu0 0.0
    %948 = vmatpush1.msra.mxu0 0.0
    %949 = vmatprep.subr.mxu0 0.0
    %950 = vmatpush1.msra.mxu0 0.0
    %951 = vmatprep.subr.mxu0 0.0
    %952 = vmatpush1.msra.mxu0 0.0
    %953 = vmatprep.subr.mxu0 0.0
    %954 = vmatpush1.msra.mxu0 0.0
    %955 = vmatprep.subr.mxu0 0.0
    %956 = vmatpush1.msra.mxu0 0.0
    %957 = vmatprep.subr.mxu0 0.0
    %958 = vmatpush1.msra.mxu0 0.0
    %959 = vmatprep.subr.mxu0 0.0
    %960 = vmatpush1.msra.mxu0 0.0
    %961 = vmatprep.subr.mxu0 0.0
    %962 = vmatpush1.msra.mxu0 0.0
    %963 = vmatprep.subr.mxu0 0.0
    %964 = vmatpush1.msra.mxu0 0.0
    %965 = vmatprep.subr.mxu0 0.0
    %966 = vmatpush1.msra.mxu0 0.0
    %967 = vmatprep.subr.mxu0 0.0
    %968 = vmatpush1.msra.mxu0 0.0
    %969 = vmatprep.subr.mxu0 0.0
    %970 = vmatpush1.msra.mxu0 0.0
    %971 = vmatprep.subr.mxu0 0.0
    %972 = vmatpush1.msra.mxu0 0.0
    %973 = vmatprep.subr.mxu0 0.0
    %974 = vmatpush1.msra.mxu0 0.0
    %975 = vmatprep.mubr.f32.mxu0 0.0
    %v976 = vand.u32 %v619, 4294901760
    %v977 = vsub.f32 %v619, %v976
    %v978 = vand.u32 %v977, 4294901760
    %979 = vmatmul.mubr.f32.gmra.mrb[0].mxu0 %v978
    %v980 = vpop.f32.mrb[0].mxu0
    %v981 = vadd.f32 %v900, %v980
    %v982 = vpop.f32.mrb[0].mxu0
    %983 = vdwg.mxu0
    %984 = vmatprep.subr.mxu0 0.0
    %v985 = vand.u32 %v603, 4294901760
    %v986 = vsub.f32 %v603, %v985
    %v987 = vand.u32 %v986, 4294901760
    %988 = vmatpush1.msra.mxu0 %v987
    %989 = vmatprep.subr.mxu0 0.0
    %v990 = vand.u32 %v604, 4294901760
    %v991 = vsub.f32 %v604, %v990
    %v992 = vand.u32 %v991, 4294901760
    %993 = vmatpush1.msra.mxu0 %v992
    %994 = vmatprep.subr.mxu0 0.0
    %v995 = vand.u32 %v605, 4294901760
    %v996 = vsub.f32 %v605, %v995
    %v997 = vand.u32 %v996, 4294901760
    %998 = vmatpush1.msra.mxu0 %v997
    %999 = vmatprep.subr.mxu0 0.0
    %v1000 = vand.u32 %v606, 4294901760
    %v1001 = vsub.f32 %v606, %v1000
    %v1002 = vand.u32 %v1001, 4294901760
    %1003 = vmatpush1.msra.mxu0 %v1002
    %1004 = vmatprep.subr.mxu0 0.0
    %v1005 = vand.u32 %v607, 4294901760
    %v1006 = vsub.f32 %v607, %v1005
    %v1007 = vand.u32 %v1006, 4294901760
    %1008 = vmatpush1.msra.mxu0 %v1007
    %1009 = vmatprep.subr.mxu0 0.0
    %v1010 = vand.u32 %v608, 4294901760
    %v1011 = vsub.f32 %v608, %v1010
    %v1012 = vand.u32 %v1011, 4294901760
    %1013 = vmatpush1.msra.mxu0 %v1012
    %1014 = vmatprep.subr.mxu0 0.0
    %v1015 = vand.u32 %v609, 4294901760
    %v1016 = vsub.f32 %v609, %v1015
    %v1017 = vand.u32 %v1016, 4294901760
    %1018 = vmatpush1.msra.mxu0 %v1017
    %1019 = vmatprep.subr.mxu0 0.0
    %v1020 = vand.u32 %v610, 4294901760
    %v1021 = vsub.f32 %v610, %v1020
    %v1022 = vand.u32 %v1021, 4294901760
    %1023 = vmatpush1.msra.mxu0 %v1022
    %1024 = vmatprep.subr.mxu0 0.0
    %1025 = vmatpush1.msra.mxu0 0.0
    %1026 = vmatprep.subr.mxu0 0.0
    %1027 = vmatpush1.msra.mxu0 0.0
    %1028 = vmatprep.subr.mxu0 0.0
    %1029 = vmatpush1.msra.mxu0 0.0
    %1030 = vmatprep.subr.mxu0 0.0
    %1031 = vmatpush1.msra.mxu0 0.0
    %1032 = vmatprep.subr.mxu0 0.0
    %1033 = vmatpush1.msra.mxu0 0.0
    %1034 = vmatprep.subr.mxu0 0.0
    %1035 = vmatpush1.msra.mxu0 0.0
    %1036 = vmatprep.subr.mxu0 0.0
    %1037 = vmatpush1.msra.mxu0 0.0
    %1038 = vmatprep.subr.mxu0 0.0
    %1039 = vmatpush1.msra.mxu0 0.0
    %1040 = vmatprep.subr.mxu0 0.0
    %1041 = vmatpush1.msra.mxu0 0.0
    %1042 = vmatprep.subr.mxu0 0.0
    %1043 = vmatpush1.msra.mxu0 0.0
    %1044 = vmatprep.subr.mxu0 0.0
    %1045 = vmatpush1.msra.mxu0 0.0
    %1046 = vmatprep.subr.mxu0 0.0
    %1047 = vmatpush1.msra.mxu0 0.0
    %1048 = vmatprep.subr.mxu0 0.0
    %1049 = vmatpush1.msra.mxu0 0.0
    %1050 = vmatprep.subr.mxu0 0.0
    %1051 = vmatpush1.msra.mxu0 0.0
    %1052 = vmatprep.subr.mxu0 0.0
    %1053 = vmatpush1.msra.mxu0 0.0
    %1054 = vmatprep.subr.mxu0 0.0
    %1055 = vmatpush1.msra.mxu0 0.0
    %1056 = vmatprep.subr.mxu0 0.0
    %1057 = vmatpush1.msra.mxu0 0.0
    %1058 = vmatprep.subr.mxu0 0.0
    %1059 = vmatpush1.msra.mxu0 0.0
    %1060 = vmatprep.subr.mxu0 0.0
    %1061 = vmatpush1.msra.mxu0 0.0
    %1062 = vmatprep.subr.mxu0 0.0
    %1063 = vmatpush1.msra.mxu0 0.0
    %1064 = vmatprep.subr.mxu0 0.0
    %1065 = vmatpush1.msra.mxu0 0.0
    %1066 = vmatprep.subr.mxu0 0.0
    %1067 = vmatpush1.msra.mxu0 0.0
    %1068 = vmatprep.subr.mxu0 0.0
    %1069 = vmatpush1.msra.mxu0 0.0
    %1070 = vmatprep.subr.mxu0 0.0
    %1071 = vmatpush1.msra.mxu0 0.0
    %1072 = vmatprep.mubr.f32.mxu0 0.0
    %v1073 = vand.u32 %v619, 4294901760
    %1074 = vmatmul.mubr.f32.gmra.mrb[0].mxu0 %v1073
    %v1075 = vpop.f32.mrb[0].mxu0
    %v1076 = vadd.f32 %v981, %v1075
    %v1077 = vpop.f32.mrb[0].mxu0
    %1078 = vdwg.mxu0
    %1079 = vmatprep.subr.mxu0 0.0
    %v1080 = vand.u32 %v603, 4294901760
    %1081 = vmatpush1.msra.mxu0 %v1080
    %1082 = vmatprep.subr.mxu0 0.0
    %v1083 = vand.u32 %v604, 4294901760
    %1084 = vmatpush1.msra.mxu0 %v1083
    %1085 = vmatprep.subr.mxu0 0.0
    %v1086 = vand.u32 %v605, 4294901760
    %1087 = vmatpush1.msra.mxu0 %v1086
    %1088 = vmatprep.subr.mxu0 0.0
    %v1089 = vand.u32 %v606, 4294901760
    %1090 = vmatpush1.msra.mxu0 %v1089
    %1091 = vmatprep.subr.mxu0 0.0
    %v1092 = vand.u32 %v607, 4294901760
    %1093 = vmatpush1.msra.mxu0 %v1092
    %1094 = vmatprep.subr.mxu0 0.0
    %v1095 = vand.u32 %v608, 4294901760
    %1096 = vmatpush1.msra.mxu0 %v1095
    %1097 = vmatprep.subr.mxu0 0.0
    %v1098 = vand.u32 %v609, 4294901760
    %1099 = vmatpush1.msra.mxu0 %v1098
    %1100 = vmatprep.subr.mxu0 0.0
    %v1101 = vand.u32 %v610, 4294901760
    %1102 = vmatpush1.msra.mxu0 %v1101
    %1103 = vmatprep.subr.mxu0 0.0
    %1104 = vmatpush1.msra.mxu0 0.0
    %1105 = vmatprep.subr.mxu0 0.0
    %1106 = vmatpush1.msra.mxu0 0.0
    %1107 = vmatprep.subr.mxu0 0.0
    %1108 = vmatpush1.msra.mxu0 0.0
    %1109 = vmatprep.subr.mxu0 0.0
    %1110 = vmatpush1.msra.mxu0 0.0
    %1111 = vmatprep.subr.mxu0 0.0
    %1112 = vmatpush1.msra.mxu0 0.0
    %1113 = vmatprep.subr.mxu0 0.0
    %1114 = vmatpush1.msra.mxu0 0.0
    %1115 = vmatprep.subr.mxu0 0.0
    %1116 = vmatpush1.msra.mxu0 0.0
    %1117 = vmatprep.subr.mxu0 0.0
    %1118 = vmatpush1.msra.mxu0 0.0
    %1119 = vmatprep.subr.mxu0 0.0
    %1120 = vmatpush1.msra.mxu0 0.0
    %1121 = vmatprep.subr.mxu0 0.0
    %1122 = vmatpush1.msra.mxu0 0.0
    %1123 = vmatprep.subr.mxu0 0.0
    %1124 = vmatpush1.msra.mxu0 0.0
    %1125 = vmatprep.subr.mxu0 0.0
    %1126 = vmatpush1.msra.mxu0 0.0
    %1127 = vmatprep.subr.mxu0 0.0
    %1128 = vmatpush1.msra.mxu0 0.0
    %1129 = vmatprep.subr.mxu0 0.0
    %1130 = vmatpush1.msra.mxu0 0.0
    %1131 = vmatprep.subr.mxu0 0.0
    %1132 = vmatpush1.msra.mxu0 0.0
    %1133 = vmatprep.subr.mxu0 0.0
    %1134 = vmatpush1.msra.mxu0 0.0
    %1135 = vmatprep.subr.mxu0 0.0
    %1136 = vmatpush1.msra.mxu0 0.0
    %1137 = vmatprep.subr.mxu0 0.0
    %1138 = vmatpush1.msra.mxu0 0.0
    %1139 = vmatprep.subr.mxu0 0.0
    %1140 = vmatpush1.msra.mxu0 0.0
    %1141 = vmatprep.subr.mxu0 0.0
    %1142 = vmatpush1.msra.mxu0 0.0
    %1143 = vmatprep.subr.mxu0 0.0
    %1144 = vmatpush1.msra.mxu0 0.0
    %1145 = vmatprep.subr.mxu0 0.0
    %1146 = vmatpush1.msra.mxu0 0.0
    %1147 = vmatprep.subr.mxu0 0.0
    %1148 = vmatpush1.msra.mxu0 0.0
    %1149 = vmatprep.subr.mxu0 0.0
    %1150 = vmatpush1.msra.mxu0 0.0
    %1151 = vmatprep.mubr.f32.mxu0 0.0
    %v1152 = vand.u32 %v619, 4294901760
    %1153 = vmatmul.mubr.f32.gmra.mrb[0].mxu0 %v1152
    %v1154 = vpop.f32.mrb[0].mxu0
    %v1155 = vadd.f32 %v1076, %v1154
    %v1156 = vpop.f32.mrb[0].mxu0
    %1157 = vdwg.mxu0
    %v1158 = vmax.f32 %v1155, 0.0
    %v1159 = vld [vmem:[%s5] sm:$0xff]
    %v1160 = vld [vmem:[#allocation2] sm:$0x1]
    %v1162 = vlaneseq
    %v1163 = vshrl.u32 %v1162, 7
    %v1164 = vsub.s32 0, %v1163
    %v1165 = vrot.slane %v1160, %v1164
    %vm1167 = vcmask 64512
    %v1169 = vsel %vm1167, %v1158, 0
    %1171 = vmatprep.subr.mxu0 0.0
    %v1172 = vand.u32 %v1159, 4294901760
    %1173 = vmatpush1.msra.mxu0 %v1172
    %1174 = vmatprep.subr.mxu0 0.0
    %1175 = vmatpush1.msra.mxu0 0.0
    %1176 = vmatprep.subr.mxu0 0.0
    %1177 = vmatpush1.msra.mxu0 0.0
    %1178 = vmatprep.subr.mxu0 0.0
    %1179 = vmatpush1.msra.mxu0 0.0
    %1180 = vmatprep.subr.mxu0 0.0
    %1181 = vmatpush1.msra.mxu0 0.0
    %1182 = vmatprep.subr.mxu0 0.0
    %1183 = vmatpush1.msra.mxu0 0.0
    %1184 = vmatprep.subr.mxu0 0.0
    %1185 = vmatpush1.msra.mxu0 0.0
    %1186 = vmatprep.subr.mxu0 0.0
    %1187 = vmatpush1.msra.mxu0 0.0
    %1188 = vmatprep.subr.mxu0 0.0
    %1189 = vmatpush1.msra.mxu0 0.0
    %1190 = vmatprep.subr.mxu0 0.0
    %1191 = vmatpush1.msra.mxu0 0.0
    %1192 = vmatprep.subr.mxu0 0.0
    %1193 = vmatpush1.msra.mxu0 0.0
    %1194 = vmatprep.subr.mxu0 0.0
    %1195 = vmatpush1.msra.mxu0 0.0
    %1196 = vmatprep.subr.mxu0 0.0
    %1197 = vmatpush1.msra.mxu0 0.0
    %1198 = vmatprep.subr.mxu0 0.0
    %1199 = vmatpush1.msra.mxu0 0.0
    %1200 = vmatprep.subr.mxu0 0.0
    %1201 = vmatpush1.msra.mxu0 0.0
    %1202 = vmatprep.subr.mxu0 0.0
    %1203 = vmatpush1.msra.mxu0 0.0
    %1204 = vmatprep.subr.mxu0 0.0
    %1205 = vmatpush1.msra.mxu0 0.0
    %1206 = vmatprep.subr.mxu0 0.0
    %1207 = vmatpush1.msra.mxu0 0.0
    %1208 = vmatprep.subr.mxu0 0.0
    %1209 = vmatpush1.msra.mxu0 0.0
    %1210 = vmatprep.subr.mxu0 0.0
    %1211 = vmatpush1.msra.mxu0 0.0
    %1212 = vmatprep.subr.mxu0 0.0
    %1213 = vmatpush1.msra.mxu0 0.0
    %1214 = vmatprep.subr.mxu0 0.0
    %1215 = vmatpush1.msra.mxu0 0.0
    %1216 = vmatprep.subr.mxu0 0.0
    %1217 = vmatpush1.msra.mxu0 0.0
    %1218 = vmatprep.subr.mxu0 0.0
    %1219 = vmatpush1.msra.mxu0 0.0
    %1220 = vmatprep.subr.mxu0 0.0
    %1221 = vmatpush1.msra.mxu0 0.0
    %1222 = vmatprep.subr.mxu0 0.0
    %1223 = vmatpush1.msra.mxu0 0.0
    %1224 = vmatprep.subr.mxu0 0.0
    %1225 = vmatpush1.msra.mxu0 0.0
    %1226 = vmatprep.subr.mxu0 0.0
    %1227 = vmatpush1.msra.mxu0 0.0
    %1228 = vmatprep.subr.mxu0 0.0
    %1229 = vmatpush1.msra.mxu0 0.0
    %1230 = vmatprep.subr.mxu0 0.0
    %1231 = vmatpush1.msra.mxu0 0.0
    %1232 = vmatprep.subr.mxu0 0.0
    %1233 = vmatpush1.msra.mxu0 0.0
    %1234 = vmatprep.subr.mxu0 0.0
    %1235 = vmatpush1.msra.mxu0 0.0
    %1236 = vmatprep.mubr.f32.mxu0 0.0
    %v1237 = vand.u32 %v1169, 4294901760
    %v1238 = vsub.f32 %v1169, %v1237
    %v1239 = vand.u32 %v1238, 4294901760
    %v1240 = vsub.f32 %v1238, %v1239
    %v1241 = vand.u32 %v1240, 4294901760
    %1242 = vmatmul.mubr.f32.gmra.mrb[0].mxu0 %v1241
    %v1243 = vpop.f32.mrb[0].mxu0
    %v1244 = vadd.f32 %v1165, %v1243
    %v1245 = vpop.f32.mrb[0].mxu0
    %1246 = vdwg.mxu0
    %1247 = vmatprep.subr.mxu0 0.0
    %v1248 = vand.u32 %v1159, 4294901760
    %v1249 = vsub.f32 %v1159, %v1248
    %v1250 = vand.u32 %v1249, 4294901760
    %v1251 = vsub.f32 %v1249, %v1250
    %v1252 = vand.u32 %v1251, 4294901760
    %1253 = vmatpush1.msra.mxu0 %v1252
    %1254 = vmatprep.subr.mxu0 0.0
    %1255 = vmatpush1.msra.mxu0 0.0
    %1256 = vmatprep.subr.mxu0 0.0
    %1257 = vmatpush1.msra.mxu0 0.0
    %1258 = vmatprep.subr.mxu0 0.0
    %1259 = vmatpush1.msra.mxu0 0.0
    %1260 = vmatprep.subr.mxu0 0.0
    %1261 = vmatpush1.msra.mxu0 0.0
    %1262 = vmatprep.subr.mxu0 0.0
    %1263 = vmatpush1.msra.mxu0 0.0
    %1264 = vmatprep.subr.mxu0 0.0
    %1265 = vmatpush1.msra.mxu0 0.0
    %1266 = vmatprep.subr.mxu0 0.0
    %1267 = vmatpush1.msra.mxu0 0.0
    %1268 = vmatprep.subr.mxu0 0.0
    %1269 = vmatpush1.msra.mxu0 0.0
    %1270 = vmatprep.subr.mxu0 0.0
    %1271 = vmatpush1.msra.mxu0 0.0
    %1272 = vmatprep.subr.mxu0 0.0
    %1273 = vmatpush1.msra.mxu0 0.0
    %1274 = vmatprep.subr.mxu0 0.0
    %1275 = vmatpush1.msra.mxu0 0.0
    %1276 = vmatprep.subr.mxu0 0.0
    %1277 = vmatpush1.msra.mxu0 0.0
    %1278 = vmatprep.subr.mxu0 0.0
    %1279 = vmatpush1.msra.mxu0 0.0
    %1280 = vmatprep.subr.mxu0 0.0
    %1281 = vmatpush1.msra.mxu0 0.0
    %1282 = vmatprep.subr.mxu0 0.0
    %1283 = vmatpush1.msra.mxu0 0.0
    %1284 = vmatprep.subr.mxu0 0.0
    %1285 = vmatpush1.msra.mxu0 0.0
    %1286 = vmatprep.subr.mxu0 0.0
    %1287 = vmatpush1.msra.mxu0 0.0
    %1288 = vmatprep.subr.mxu0 0.0
    %1289 = vmatpush1.msra.mxu0 0.0
    %1290 = vmatprep.subr.mxu0 0.0
    %1291 = vmatpush1.msra.mxu0 0.0
    %1292 = vmatprep.subr.mxu0 0.0
    %1293 = vmatpush1.msra.mxu0 0.0
    %1294 = vmatprep.subr.mxu0 0.0
    %1295 = vmatpush1.msra.mxu0 0.0
    %1296 = vmatprep.subr.mxu0 0.0
    %1297 = vmatpush1.msra.mxu0 0.0
    %1298 = vmatprep.subr.mxu0 0.0
    %1299 = vmatpush1.msra.mxu0 0.0
    %1300 = vmatprep.subr.mxu0 0.0
    %1301 = vmatpush1.msra.mxu0 0.0
    %1302 = vmatprep.subr.mxu0 0.0
    %1303 = vmatpush1.msra.mxu0 0.0
    %1304 = vmatprep.subr.mxu0 0.0
    %1305 = vmatpush1.msra.mxu0 0.0
    %1306 = vmatprep.subr.mxu0 0.0
    %1307 = vmatpush1.msra.mxu0 0.0
    %1308 = vmatprep.subr.mxu0 0.0
    %1309 = vmatpush1.msra.mxu0 0.0
    %1310 = vmatprep.subr.mxu0 0.0
    %1311 = vmatpush1.msra.mxu0 0.0
    %1312 = vmatprep.subr.mxu0 0.0
    %1313 = vmatpush1.msra.mxu0 0.0
    %1314 = vmatprep.subr.mxu0 0.0
    %1315 = vmatpush1.msra.mxu0 0.0
    %1316 = vmatprep.mubr.f32.mxu0 0.0
    %v1317 = vand.u32 %v1169, 4294901760
    %1318 = vmatmul.mubr.f32.gmra.mrb[0].mxu0 %v1317
    %v1319 = vpop.f32.mrb[0].mxu0
    %v1320 = vadd.f32 %v1244, %v1319
    %v1321 = vpop.f32.mrb[0].mxu0
    %1322 = vdwg.mxu0
    %1323 = vmatprep.subr.mxu0 0.0
    %v1324 = vand.u32 %v1159, 4294901760
    %v1325 = vsub.f32 %v1159, %v1324
    %1326 = vmatpush1.msra.mxu0 %v1325
    %1327 = vmatprep.subr.mxu0 0.0
    %1328 = vmatpush1.msra.mxu0 0.0
    %1329 = vmatprep.subr.mxu0 0.0
    %1330 = vmatpush1.msra.mxu0 0.0
    %1331 = vmatprep.subr.mxu0 0.0
    %1332 = vmatpush1.msra.mxu0 0.0
    %1333 = vmatprep.subr.mxu0 0.0
    %1334 = vmatpush1.msra.mxu0 0.0
    %1335 = vmatprep.subr.mxu0 0.0
    %1336 = vmatpush1.msra.mxu0 0.0
    %1337 = vmatprep.subr.mxu0 0.0
    %1338 = vmatpush1.msra.mxu0 0.0
    %1339 = vmatprep.subr.mxu0 0.0
    %1340 = vmatpush1.msra.mxu0 0.0
    %1341 = vmatprep.subr.mxu0 0.0
    %1342 = vmatpush1.msra.mxu0 0.0
    %1343 = vmatprep.subr.mxu0 0.0
    %1344 = vmatpush1.msra.mxu0 0.0
    %1345 = vmatprep.subr.mxu0 0.0
    %1346 = vmatpush1.msra.mxu0 0.0
    %1347 = vmatprep.subr.mxu0 0.0
    %1348 = vmatpush1.msra.mxu0 0.0
    %1349 = vmatprep.subr.mxu0 0.0
    %1350 = vmatpush1.msra.mxu0 0.0
    %1351 = vmatprep.subr.mxu0 0.0
    %1352 = vmatpush1.msra.mxu0 0.0
    %1353 = vmatprep.subr.mxu0 0.0
    %1354 = vmatpush1.msra.mxu0 0.0
    %1355 = vmatprep.subr.mxu0 0.0
    %1356 = vmatpush1.msra.mxu0 0.0
    %1357 = vmatprep.subr.mxu0 0.0
    %1358 = vmatpush1.msra.mxu0 0.0
    %1359 = vmatprep.subr.mxu0 0.0
    %1360 = vmatpush1.msra.mxu0 0.0
    %1361 = vmatprep.subr.mxu0 0.0
    %1362 = vmatpush1.msra.mxu0 0.0
    %1363 = vmatprep.subr.mxu0 0.0
    %1364 = vmatpush1.msra.mxu0 0.0
    %1365 = vmatprep.subr.mxu0 0.0
    %1366 = vmatpush1.msra.mxu0 0.0
    %1367 = vmatprep.subr.mxu0 0.0
    %1368 = vmatpush1.msra.mxu0 0.0
    %1369 = vmatprep.subr.mxu0 0.0
    %1370 = vmatpush1.msra.mxu0 0.0
    %1371 = vmatprep.subr.mxu0 0.0
    %1372 = vmatpush1.msra.mxu0 0.0
    %1373 = vmatprep.subr.mxu0 0.0
    %1374 = vmatpush1.msra.mxu0 0.0
    %1375 = vmatprep.subr.mxu0 0.0
    %1376 = vmatpush1.msra.mxu0 0.0
    %1377 = vmatprep.subr.mxu0 0.0
    %1378 = vmatpush1.msra.mxu0 0.0
    %1379 = vmatprep.subr.mxu0 0.0
    %1380 = vmatpush1.msra.mxu0 0.0
    %1381 = vmatprep.subr.mxu0 0.0
    %1382 = vmatpush1.msra.mxu0 0.0
    %1383 = vmatprep.subr.mxu0 0.0
    %1384 = vmatpush1.msra.mxu0 0.0
    %1385 = vmatprep.subr.mxu0 0.0
    %1386 = vmatpush1.msra.mxu0 0.0
    %1387 = vmatprep.subr.mxu0 0.0
    %1388 = vmatpush1.msra.mxu0 0.0
    %1389 = vmatprep.mubr.f32.mxu0 0.0
    %v1390 = vand.u32 %v1169, 4294901760
    %v1391 = vsub.f32 %v1169, %v1390
    %1392 = vmatmul.mubr.f32.gmra.mrb[0].mxu0 %v1391
    %v1393 = vpop.f32.mrb[0].mxu0
    %v1394 = vadd.f32 %v1320, %v1393
    %v1395 = vpop.f32.mrb[0].mxu0
    %1396 = vdwg.mxu0
    %1397 = vmatprep.subr.mxu0 0.0
    %v1398 = vand.u32 %v1159, 4294901760
    %1399 = vmatpush1.msra.mxu0 %v1398
    %1400 = vmatprep.subr.mxu0 0.0
    %1401 = vmatpush1.msra.mxu0 0.0
    %1402 = vmatprep.subr.mxu0 0.0
    %1403 = vmatpush1.msra.mxu0 0.0
    %1404 = vmatprep.subr.mxu0 0.0
    %1405 = vmatpush1.msra.mxu0 0.0
    %1406 = vmatprep.subr.mxu0 0.0
    %1407 = vmatpush1.msra.mxu0 0.0
    %1408 = vmatprep.subr.mxu0 0.0
    %1409 = vmatpush1.msra.mxu0 0.0
    %1410 = vmatprep.subr.mxu0 0.0
    %1411 = vmatpush1.msra.mxu0 0.0
    %1412 = vmatprep.subr.mxu0 0.0
    %1413 = vmatpush1.msra.mxu0 0.0
    %1414 = vmatprep.subr.mxu0 0.0
    %1415 = vmatpush1.msra.mxu0 0.0
    %1416 = vmatprep.subr.mxu0 0.0
    %1417 = vmatpush1.msra.mxu0 0.0
    %1418 = vmatprep.subr.mxu0 0.0
    %1419 = vmatpush1.msra.mxu0 0.0
    %1420 = vmatprep.subr.mxu0 0.0
    %1421 = vmatpush1.msra.mxu0 0.0
    %1422 = vmatprep.subr.mxu0 0.0
    %1423 = vmatpush1.msra.mxu0 0.0
    %1424 = vmatprep.subr.mxu0 0.0
    %1425 = vmatpush1.msra.mxu0 0.0
    %1426 = vmatprep.subr.mxu0 0.0
    %1427 = vmatpush1.msra.mxu0 0.0
    %1428 = vmatprep.subr.mxu0 0.0
    %1429 = vmatpush1.msra.mxu0 0.0
    %1430 = vmatprep.subr.mxu0 0.0
    %1431 = vmatpush1.msra.mxu0 0.0
    %1432 = vmatprep.subr.mxu0 0.0
    %1433 = vmatpush1.msra.mxu0 0.0
    %1434 = vmatprep.subr.mxu0 0.0
    %1435 = vmatpush1.msra.mxu0 0.0
    %1436 = vmatprep.subr.mxu0 0.0
    %1437 = vmatpush1.msra.mxu0 0.0
    %1438 = vmatprep.subr.mxu0 0.0
    %1439 = vmatpush1.msra.mxu0 0.0
    %1440 = vmatprep.subr.mxu0 0.0
    %1441 = vmatpush1.msra.mxu0 0.0
    %1442 = vmatprep.subr.mxu0 0.0
    %1443 = vmatpush1.msra.mxu0 0.0
    %1444 = vmatprep.subr.mxu0 0.0
    %1445 = vmatpush1.msra.mxu0 0.0
    %1446 = vmatprep.subr.mxu0 0.0
    %1447 = vmatpush1.msra.mxu0 0.0
    %1448 = vmatprep.subr.mxu0 0.0
    %1449 = vmatpush1.msra.mxu0 0.0
    %1450 = vmatprep.subr.mxu0 0.0
    %1451 = vmatpush1.msra.mxu0 0.0
    %1452 = vmatprep.subr.mxu0 0.0
    %1453 = vmatpush1.msra.mxu0 0.0
    %1454 = vmatprep.subr.mxu0 0.0
    %1455 = vmatpush1.msra.mxu0 0.0
    %1456 = vmatprep.subr.mxu0 0.0
    %1457 = vmatpush1.msra.mxu0 0.0
    %1458 = vmatprep.subr.mxu0 0.0
    %1459 = vmatpush1.msra.mxu0 0.0
    %1460 = vmatprep.subr.mxu0 0.0
    %1461 = vmatpush1.msra.mxu0 0.0
    %1462 = vmatprep.mubr.f32.mxu0 0.0
    %v1463 = vand.u32 %v1169, 4294901760
    %v1464 = vsub.f32 %v1169, %v1463
    %v1465 = vand.u32 %v1464, 4294901760
    %1466 = vmatmul.mubr.f32.gmra.mrb[0].mxu0 %v1465
    %v1467 = vpop.f32.mrb[0].mxu0
    %v1468 = vadd.f32 %v1394, %v1467
    %v1469 = vpop.f32.mrb[0].mxu0
    %1470 = vdwg.mxu0
    %1471 = vmatprep.subr.mxu0 0.0
    %v1472 = vand.u32 %v1159, 4294901760
    %v1473 = vsub.f32 %v1159, %v1472
    %v1474 = vand.u32 %v1473, 4294901760
    %1475 = vmatpush1.msra.mxu0 %v1474
    %1476 = vmatprep.subr.mxu0 0.0
    %1477 = vmatpush1.msra.mxu0 0.0
    %1478 = vmatprep.subr.mxu0 0.0
    %1479 = vmatpush1.msra.mxu0 0.0
    %1480 = vmatprep.subr.mxu0 0.0
    %1481 = vmatpush1.msra.mxu0 0.0
    %1482 = vmatprep.subr.mxu0 0.0
    %1483 = vmatpush1.msra.mxu0 0.0
    %1484 = vmatprep.subr.mxu0 0.0
    %1485 = vmatpush1.msra.mxu0 0.0
    %1486 = vmatprep.subr.mxu0 0.0
    %1487 = vmatpush1.msra.mxu0 0.0
    %1488 = vmatprep.subr.mxu0 0.0
    %1489 = vmatpush1.msra.mxu0 0.0
    %1490 = vmatprep.subr.mxu0 0.0
    %1491 = vmatpush1.msra.mxu0 0.0
    %1492 = vmatprep.subr.mxu0 0.0
    %1493 = vmatpush1.msra.mxu0 0.0
    %1494 = vmatprep.subr.mxu0 0.0
    %1495 = vmatpush1.msra.mxu0 0.0
    %1496 = vmatprep.subr.mxu0 0.0
    %1497 = vmatpush1.msra.mxu0 0.0
    %1498 = vmatprep.subr.mxu0 0.0
    %1499 = vmatpush1.msra.mxu0 0.0
    %1500 = vmatprep.subr.mxu0 0.0
    %1501 = vmatpush1.msra.mxu0 0.0
    %1502 = vmatprep.subr.mxu0 0.0
    %1503 = vmatpush1.msra.mxu0 0.0
    %1504 = vmatprep.subr.mxu0 0.0
    %1505 = vmatpush1.msra.mxu0 0.0
    %1506 = vmatprep.subr.mxu0 0.0
    %1507 = vmatpush1.msra.mxu0 0.0
    %1508 = vmatprep.subr.mxu0 0.0
    %1509 = vmatpush1.msra.mxu0 0.0
    %1510 = vmatprep.subr.mxu0 0.0
    %1511 = vmatpush1.msra.mxu0 0.0
    %1512 = vmatprep.subr.mxu0 0.0
    %1513 = vmatpush1.msra.mxu0 0.0
    %1514 = vmatprep.subr.mxu0 0.0
    %1515 = vmatpush1.msra.mxu0 0.0
    %1516 = vmatprep.subr.mxu0 0.0
    %1517 = vmatpush1.msra.mxu0 0.0
    %1518 = vmatprep.subr.mxu0 0.0
    %1519 = vmatpush1.msra.mxu0 0.0
    %1520 = vmatprep.subr.mxu0 0.0
    %1521 = vmatpush1.msra.mxu0 0.0
    %1522 = vmatprep.subr.mxu0 0.0
    %1523 = vmatpush1.msra.mxu0 0.0
    %1524 = vmatprep.subr.mxu0 0.0
    %1525 = vmatpush1.msra.mxu0 0.0
    %1526 = vmatprep.subr.mxu0 0.0
    %1527 = vmatpush1.msra.mxu0 0.0
    %1528 = vmatprep.subr.mxu0 0.0
    %1529 = vmatpush1.msra.mxu0 0.0
    %1530 = vmatprep.subr.mxu0 0.0
    %1531 = vmatpush1.msra.mxu0 0.0
    %1532 = vmatprep.subr.mxu0 0.0
    %1533 = vmatpush1.msra.mxu0 0.0
    %1534 = vmatprep.subr.mxu0 0.0
    %1535 = vmatpush1.msra.mxu0 0.0
    %1536 = vmatprep.subr.mxu0 0.0
    %1537 = vmatpush1.msra.mxu0 0.0
    %1538 = vmatprep.mubr.f32.mxu0 0.0
    %v1539 = vand.u32 %v1169, 4294901760
    %1540 = vmatmul.mubr.f32.gmra.mrb[0].mxu0 %v1539
    %v1541 = vpop.f32.mrb[0].mxu0
    %v1542 = vadd.f32 %v1468, %v1541
    %v1543 = vpop.f32.mrb[0].mxu0
    %1544 = vdwg.mxu0
    %1545 = vmatprep.subr.mxu0 0.0
    %v1546 = vand.u32 %v1159, 4294901760
    %1547 = vmatpush1.msra.mxu0 %v1546
    %1548 = vmatprep.subr.mxu0 0.0
    %1549 = vmatpush1.msra.mxu0 0.0
    %1550 = vmatprep.subr.mxu0 0.0
    %1551 = vmatpush1.msra.mxu0 0.0
    %1552 = vmatprep.subr.mxu0 0.0
    %1553 = vmatpush1.msra.mxu0 0.0
    %1554 = vmatprep.subr.mxu0 0.0
    %1555 = vmatpush1.msra.mxu0 0.0
    %1556 = vmatprep.subr.mxu0 0.0
    %1557 = vmatpush1.msra.mxu0 0.0
    %1558 = vmatprep.subr.mxu0 0.0
    %1559 = vmatpush1.msra.mxu0 0.0
    %1560 = vmatprep.subr.mxu0 0.0
    %1561 = vmatpush1.msra.mxu0 0.0
    %1562 = vmatprep.subr.mxu0 0.0
    %1563 = vmatpush1.msra.mxu0 0.0
    %1564 = vmatprep.subr.mxu0 0.0
    %1565 = vmatpush1.msra.mxu0 0.0
    %1566 = vmatprep.subr.mxu0 0.0
    %1567 = vmatpush1.msra.mxu0 0.0
    %1568 = vmatprep.subr.mxu0 0.0
    %1569 = vmatpush1.msra.mxu0 0.0
    %1570 = vmatprep.subr.mxu0 0.0
    %1571 = vmatpush1.msra.mxu0 0.0
    %1572 = vmatprep.subr.mxu0 0.0
    %1573 = vmatpush1.msra.mxu0 0.0
    %1574 = vmatprep.subr.mxu0 0.0
    %1575 = vmatpush1.msra.mxu0 0.0
    %1576 = vmatprep.subr.mxu0 0.0
    %1577 = vmatpush1.msra.mxu0 0.0
    %1578 = vmatprep.subr.mxu0 0.0
    %1579 = vmatpush1.msra.mxu0 0.0
    %1580 = vmatprep.subr.mxu0 0.0
    %1581 = vmatpush1.msra.mxu0 0.0
    %1582 = vmatprep.subr.mxu0 0.0
    %1583 = vmatpush1.msra.mxu0 0.0
    %1584 = vmatprep.subr.mxu0 0.0
    %1585 = vmatpush1.msra.mxu0 0.0
    %1586 = vmatprep.subr.mxu0 0.0
    %1587 = vmatpush1.msra.mxu0 0.0
    %1588 = vmatprep.subr.mxu0 0.0
    %1589 = vmatpush1.msra.mxu0 0.0
    %1590 = vmatprep.subr.mxu0 0.0
    %1591 = vmatpush1.msra.mxu0 0.0
    %1592 = vmatprep.subr.mxu0 0.0
    %1593 = vmatpush1.msra.mxu0 0.0
    %1594 = vmatprep.subr.mxu0 0.0
    %1595 = vmatpush1.msra.mxu0 0.0
    %1596 = vmatprep.subr.mxu0 0.0
    %1597 = vmatpush1.msra.mxu0 0.0
    %1598 = vmatprep.subr.mxu0 0.0
    %1599 = vmatpush1.msra.mxu0 0.0
    %1600 = vmatprep.subr.mxu0 0.0
    %1601 = vmatpush1.msra.mxu0 0.0
    %1602 = vmatprep.subr.mxu0 0.0
    %1603 = vmatpush1.msra.mxu0 0.0
    %1604 = vmatprep.subr.mxu0 0.0
    %1605 = vmatpush1.msra.mxu0 0.0
    %1606 = vmatprep.subr.mxu0 0.0
    %1607 = vmatpush1.msra.mxu0 0.0
    %1608 = vmatprep.subr.mxu0 0.0
    %1609 = vmatpush1.msra.mxu0 0.0
    %1610 = vmatprep.mubr.f32.mxu0 0.0
    %v1611 = vand.u32 %v1169, 4294901760
    %1612 = vmatmul.mubr.f32.gmra.mrb[0].mxu0 %v1611
    %v1613 = vpop.f32.mrb[0].mxu0
    %v1614 = vadd.f32 %v1542, %v1613
    %v1615 = vpop.f32.mrb[0].mxu0
    %1616 = vdwg.mxu0
    %v1617 = vmax.f32 %v1614, 0.0
    %v1618 = vld [vmem:[%s7] sm:$0xff]
    %v1619 = vld [vmem:[%s8] sm:$0x1]
    %v1621 = vlaneseq
    %v1622 = vshrl.u32 %v1621, 7
    %v1623 = vsub.s32 0, %v1622
    %v1624 = vrot.slane %v1619, %v1623
    %v1627 = vsel %vm1167, %v1617, 0
    %1629 = vmatprep.subr.mxu0 0.0
    %v1630 = vand.u32 %v1618, 4294901760
    %1631 = vmatpush1.msra.mxu0 %v1630
    %1632 = vmatprep.subr.mxu0 0.0
    %1633 = vmatpush1.msra.mxu0 0.0
    %1634 = vmatprep.subr.mxu0 0.0
    %1635 = vmatpush1.msra.mxu0 0.0
    %1636 = vmatprep.subr.mxu0 0.0
    %1637 = vmatpush1.msra.mxu0 0.0
    %1638 = vmatprep.subr.mxu0 0.0
    %1639 = vmatpush1.msra.mxu0 0.0
    %1640 = vmatprep.subr.mxu0 0.0
    %1641 = vmatpush1.msra.mxu0 0.0
    %1642 = vmatprep.subr.mxu0 0.0
    %1643 = vmatpush1.msra.mxu0 0.0
    %1644 = vmatprep.subr.mxu0 0.0
    %1645 = vmatpush1.msra.mxu0 0.0
    %1646 = vmatprep.subr.mxu0 0.0
    %1647 = vmatpush1.msra.mxu0 0.0
    %1648 = vmatprep.subr.mxu0 0.0
    %1649 = vmatpush1.msra.mxu0 0.0
    %1650 = vmatprep.subr.mxu0 0.0
    %1651 = vmatpush1.msra.mxu0 0.0
    %1652 = vmatprep.subr.mxu0 0.0
    %1653 = vmatpush1.msra.mxu0 0.0
    %1654 = vmatprep.subr.mxu0 0.0
    %1655 = vmatpush1.msra.mxu0 0.0
    %1656 = vmatprep.subr.mxu0 0.0
    %1657 = vmatpush1.msra.mxu0 0.0
    %1658 = vmatprep.subr.mxu0 0.0
    %1659 = vmatpush1.msra.mxu0 0.0
    %1660 = vmatprep.subr.mxu0 0.0
    %1661 = vmatpush1.msra.mxu0 0.0
    %1662 = vmatprep.subr.mxu0 0.0
    %1663 = vmatpush1.msra.mxu0 0.0
    %1664 = vmatprep.subr.mxu0 0.0
    %1665 = vmatpush1.msra.mxu0 0.0
    %1666 = vmatprep.subr.mxu0 0.0
    %1667 = vmatpush1.msra.mxu0 0.0
    %1668 = vmatprep.subr.mxu0 0.0
    %1669 = vmatpush1.msra.mxu0 0.0
    %1670 = vmatprep.subr.mxu0 0.0
    %1671 = vmatpush1.msra.mxu0 0.0
    %1672 = vmatprep.subr.mxu0 0.0
    %1673 = vmatpush1.msra.mxu0 0.0
    %1674 = vmatprep.subr.mxu0 0.0
    %1675 = vmatpush1.msra.mxu0 0.0
    %1676 = vmatprep.subr.mxu0 0.0
    %1677 = vmatpush1.msra.mxu0 0.0
    %1678 = vmatprep.subr.mxu0 0.0
    %1679 = vmatpush1.msra.mxu0 0.0
    %1680 = vmatprep.subr.mxu0 0.0
    %1681 = vmatpush1.msra.mxu0 0.0
    %1682 = vmatprep.subr.mxu0 0.0
    %1683 = vmatpush1.msra.mxu0 0.0
    %1684 = vmatprep.subr.mxu0 0.0
    %1685 = vmatpush1.msra.mxu0 0.0
    %1686 = vmatprep.subr.mxu0 0.0
    %1687 = vmatpush1.msra.mxu0 0.0
    %1688 = vmatprep.subr.mxu0 0.0
    %1689 = vmatpush1.msra.mxu0 0.0
    %1690 = vmatprep.subr.mxu0 0.0
    %1691 = vmatpush1.msra.mxu0 0.0
    %1692 = vmatprep.subr.mxu0 0.0
    %1693 = vmatpush1.msra.mxu0 0.0
    %1694 = vmatprep.mubr.f32.mxu0 0.0
    %v1695 = vand.u32 %v1627, 4294901760
    %v1696 = vsub.f32 %v1627, %v1695
    %v1697 = vand.u32 %v1696, 4294901760
    %v1698 = vsub.f32 %v1696, %v1697
    %v1699 = vand.u32 %v1698, 4294901760
    %1700 = vmatmul.mubr.f32.gmra.mrb[0].mxu0 %v1699
    %v1701 = vpop.f32.mrb[0].mxu0
    %v1702 = vadd.f32 %v1624, %v1701
    %v1703 = vpop.f32.mrb[0].mxu0
    %1704 = vdwg.mxu0
    %1705 = vmatprep.subr.mxu0 0.0
    %v1706 = vand.u32 %v1618, 4294901760
    %v1707 = vsub.f32 %v1618, %v1706
    %v1708 = vand.u32 %v1707, 4294901760
    %v1709 = vsub.f32 %v1707, %v1708
    %v1710 = vand.u32 %v1709, 4294901760
    %1711 = vmatpush1.msra.mxu0 %v1710
    %1712 = vmatprep.subr.mxu0 0.0
    %1713 = vmatpush1.msra.mxu0 0.0
    %1714 = vmatprep.subr.mxu0 0.0
    %1715 = vmatpush1.msra.mxu0 0.0
    %1716 = vmatprep.subr.mxu0 0.0
    %1717 = vmatpush1.msra.mxu0 0.0
    %1718 = vmatprep.subr.mxu0 0.0
    %1719 = vmatpush1.msra.mxu0 0.0
    %1720 = vmatprep.subr.mxu0 0.0
    %1721 = vmatpush1.msra.mxu0 0.0
    %1722 = vmatprep.subr.mxu0 0.0
    %1723 = vmatpush1.msra.mxu0 0.0
    %1724 = vmatprep.subr.mxu0 0.0
    %1725 = vmatpush1.msra.mxu0 0.0
    %1726 = vmatprep.subr.mxu0 0.0
    %1727 = vmatpush1.msra.mxu0 0.0
    %1728 = vmatprep.subr.mxu0 0.0
    %1729 = vmatpush1.msra.mxu0 0.0
    %1730 = vmatprep.subr.mxu0 0.0
    %1731 = vmatpush1.msra.mxu0 0.0
    %1732 = vmatprep.subr.mxu0 0.0
    %1733 = vmatpush1.msra.mxu0 0.0
    %1734 = vmatprep.subr.mxu0 0.0
    %1735 = vmatpush1.msra.mxu0 0.0
    %1736 = vmatprep.subr.mxu0 0.0
    %1737 = vmatpush1.msra.mxu0 0.0
    %1738 = vmatprep.subr.mxu0 0.0
    %1739 = vmatpush1.msra.mxu0 0.0
    %1740 = vmatprep.subr.mxu0 0.0
    %1741 = vmatpush1.msra.mxu0 0.0
    %1742 = vmatprep.subr.mxu0 0.0
    %1743 = vmatpush1.msra.mxu0 0.0
    %1744 = vmatprep.subr.mxu0 0.0
    %1745 = vmatpush1.msra.mxu0 0.0
    %1746 = vmatprep.subr.mxu0 0.0
    %1747 = vmatpush1.msra.mxu0 0.0
    %1748 = vmatprep.subr.mxu0 0.0
    %1749 = vmatpush1.msra.mxu0 0.0
    %1750 = vmatprep.subr.mxu0 0.0
    %1751 = vmatpush1.msra.mxu0 0.0
    %1752 = vmatprep.subr.mxu0 0.0
    %1753 = vmatpush1.msra.mxu0 0.0
    %1754 = vmatprep.subr.mxu0 0.0
    %1755 = vmatpush1.msra.mxu0 0.0
    %1756 = vmatprep.subr.mxu0 0.0
    %1757 = vmatpush1.msra.mxu0 0.0
    %1758 = vmatprep.subr.mxu0 0.0
    %1759 = vmatpush1.msra.mxu0 0.0
    %1760 = vmatprep.subr.mxu0 0.0
    %1761 = vmatpush1.msra.mxu0 0.0
    %1762 = vmatprep.subr.mxu0 0.0
    %1763 = vmatpush1.msra.mxu0 0.0
    %1764 = vmatprep.subr.mxu0 0.0
    %1765 = vmatpush1.msra.mxu0 0.0
    %1766 = vmatprep.subr.mxu0 0.0
    %1767 = vmatpush1.msra.mxu0 0.0
    %1768 = vmatprep.subr.mxu0 0.0
    %1769 = vmatpush1.msra.mxu0 0.0
    %1770 = vmatprep.subr.mxu0 0.0
    %1771 = vmatpush1.msra.mxu0 0.0
    %1772 = vmatprep.subr.mxu0 0.0
    %1773 = vmatpush1.msra.mxu0 0.0
    %1774 = vmatprep.mubr.f32.mxu0 0.0
    %v1775 = vand.u32 %v1627, 4294901760
    %1776 = vmatmul.mubr.f32.gmra.mrb[0].mxu0 %v1775
    %v1777 = vpop.f32.mrb[0].mxu0
    %v1778 = vadd.f32 %v1702, %v1777
    %v1779 = vpop.f32.mrb[0].mxu0
    %1780 = vdwg.mxu0
    %1781 = vmatprep.subr.mxu0 0.0
    %v1782 = vand.u32 %v1618, 4294901760
    %v1783 = vsub.f32 %v1618, %v1782
    %1784 = vmatpush1.msra.mxu0 %v1783
    %1785 = vmatprep.subr.mxu0 0.0
    %1786 = vmatpush1.msra.mxu0 0.0
    %1787 = vmatprep.subr.mxu0 0.0
    %1788 = vmatpush1.msra.mxu0 0.0
    %1789 = vmatprep.subr.mxu0 0.0
    %1790 = vmatpush1.msra.mxu0 0.0
    %1791 = vmatprep.subr.mxu0 0.0
    %1792 = vmatpush1.msra.mxu0 0.0
    %1793 = vmatprep.subr.mxu0 0.0
    %1794 = vmatpush1.msra.mxu0 0.0
    %1795 = vmatprep.subr.mxu0 0.0
    %1796 = vmatpush1.msra.mxu0 0.0
    %1797 = vmatprep.subr.mxu0 0.0
    %1798 = vmatpush1.msra.mxu0 0.0
    %1799 = vmatprep.subr.mxu0 0.0
    %1800 = vmatpush1.msra.mxu0 0.0
    %1801 = vmatprep.subr.mxu0 0.0
    %1802 = vmatpush1.msra.mxu0 0.0
    %1803 = vmatprep.subr.mxu0 0.0
    %1804 = vmatpush1.msra.mxu0 0.0
    %1805 = vmatprep.subr.mxu0 0.0
    %1806 = vmatpush1.msra.mxu0 0.0
    %1807 = vmatprep.subr.mxu0 0.0
    %1808 = vmatpush1.msra.mxu0 0.0
    %1809 = vmatprep.subr.mxu0 0.0
    %1810 = vmatpush1.msra.mxu0 0.0
    %1811 = vmatprep.subr.mxu0 0.0
    %1812 = vmatpush1.msra.mxu0 0.0
    %1813 = vmatprep.subr.mxu0 0.0
    %1814 = vmatpush1.msra.mxu0 0.0
    %1815 = vmatprep.subr.mxu0 0.0
    %1816 = vmatpush1.msra.mxu0 0.0
    %1817 = vmatprep.subr.mxu0 0.0
    %1818 = vmatpush1.msra.mxu0 0.0
    %1819 = vmatprep.subr.mxu0 0.0
    %1820 = vmatpush1.msra.mxu0 0.0
    %1821 = vmatprep.subr.mxu0 0.0
    %1822 = vmatpush1.msra.mxu0 0.0
    %1823 = vmatprep.subr.mxu0 0.0
    %1824 = vmatpush1.msra.mxu0 0.0
    %1825 = vmatprep.subr.mxu0 0.0
    %1826 = vmatpush1.msra.mxu0 0.0
    %1827 = vmatprep.subr.mxu0 0.0
    %1828 = vmatpush1.msra.mxu0 0.0
    %1829 = vmatprep.subr.mxu0 0.0
    %1830 = vmatpush1.msra.mxu0 0.0
    %1831 = vmatprep.subr.mxu0 0.0
    %1832 = vmatpush1.msra.mxu0 0.0
    %1833 = vmatprep.subr.mxu0 0.0
    %1834 = vmatpush1.msra.mxu0 0.0
    %1835 = vmatprep.subr.mxu0 0.0
    %1836 = vmatpush1.msra.mxu0 0.0
    %1837 = vmatprep.subr.mxu0 0.0
    %1838 = vmatpush1.msra.mxu0 0.0
    %1839 = vmatprep.subr.mxu0 0.0
    %1840 = vmatpush1.msra.mxu0 0.0
    %1841 = vmatprep.subr.mxu0 0.0
    %1842 = vmatpush1.msra.mxu0 0.0
    %1843 = vmatprep.subr.mxu0 0.0
    %1844 = vmatpush1.msra.mxu0 0.0
    %1845 = vmatprep.subr.mxu0 0.0
    %1846 = vmatpush1.msra.mxu0 0.0
    %1847 = vmatprep.mubr.f32.mxu0 0.0
    %v1848 = vand.u32 %v1627, 4294901760
    %v1849 = vsub.f32 %v1627, %v1848
    %1850 = vmatmul.mubr.f32.gmra.mrb[0].mxu0 %v1849
    %v1851 = vpop.f32.mrb[0].mxu0
    %v1852 = vadd.f32 %v1778, %v1851
    %v1853 = vpop.f32.mrb[0].mxu0
    %1854 = vdwg.mxu0
    %1855 = vmatprep.subr.mxu0 0.0
    %v1856 = vand.u32 %v1618, 4294901760
    %1857 = vmatpush1.msra.mxu0 %v1856
    %1858 = vmatprep.subr.mxu0 0.0
    %1859 = vmatpush1.msra.mxu0 0.0
    %1860 = vmatprep.subr.mxu0 0.0
    %1861 = vmatpush1.msra.mxu0 0.0
    %1862 = vmatprep.subr.mxu0 0.0
    %1863 = vmatpush1.msra.mxu0 0.0
    %1864 = vmatprep.subr.mxu0 0.0
    %1865 = vmatpush1.msra.mxu0 0.0
    %1866 = vmatprep.subr.mxu0 0.0
    %1867 = vmatpush1.msra.mxu0 0.0
    %1868 = vmatprep.subr.mxu0 0.0
    %1869 = vmatpush1.msra.mxu0 0.0
    %1870 = vmatprep.subr.mxu0 0.0
    %1871 = vmatpush1.msra.mxu0 0.0
    %1872 = vmatprep.subr.mxu0 0.0
    %1873 = vmatpush1.msra.mxu0 0.0
    %1874 = vmatprep.subr.mxu0 0.0
    %1875 = vmatpush1.msra.mxu0 0.0
    %1876 = vmatprep.subr.mxu0 0.0
    %1877 = vmatpush1.msra.mxu0 0.0
    %1878 = vmatprep.subr.mxu0 0.0
    %1879 = vmatpush1.msra.mxu0 0.0
    %1880 = vmatprep.subr.mxu0 0.0
    %1881 = vmatpush1.msra.mxu0 0.0
    %1882 = vmatprep.subr.mxu0 0.0
    %1883 = vmatpush1.msra.mxu0 0.0
    %1884 = vmatprep.subr.mxu0 0.0
    %1885 = vmatpush1.msra.mxu0 0.0
    %1886 = vmatprep.subr.mxu0 0.0
    %1887 = vmatpush1.msra.mxu0 0.0
    %1888 = vmatprep.subr.mxu0 0.0
    %1889 = vmatpush1.msra.mxu0 0.0
    %1890 = vmatprep.subr.mxu0 0.0
    %1891 = vmatpush1.msra.mxu0 0.0
    %1892 = vmatprep.subr.mxu0 0.0
    %1893 = vmatpush1.msra.mxu0 0.0
    %1894 = vmatprep.subr.mxu0 0.0
    %1895 = vmatpush1.msra.mxu0 0.0
    %1896 = vmatprep.subr.mxu0 0.0
    %1897 = vmatpush1.msra.mxu0 0.0
    %1898 = vmatprep.subr.mxu0 0.0
    %1899 = vmatpush1.msra.mxu0 0.0
    %1900 = vmatprep.subr.mxu0 0.0
    %1901 = vmatpush1.msra.mxu0 0.0
    %1902 = vmatprep.subr.mxu0 0.0
    %1903 = vmatpush1.msra.mxu0 0.0
    %1904 = vmatprep.subr.mxu0 0.0
    %1905 = vmatpush1.msra.mxu0 0.0
    %1906 = vmatprep.subr.mxu0 0.0
    %1907 = vmatpush1.msra.mxu0 0.0
    %1908 = vmatprep.subr.mxu0 0.0
    %1909 = vmatpush1.msra.mxu0 0.0
    %1910 = vmatprep.subr.mxu0 0.0
    %1911 = vmatpush1.msra.mxu0 0.0
    %1912 = vmatprep.subr.mxu0 0.0
    %1913 = vmatpush1.msra.mxu0 0.0
    %1914 = vmatprep.subr.mxu0 0.0
    %1915 = vmatpush1.msra.mxu0 0.0
    %1916 = vmatprep.subr.mxu0 0.0
    %1917 = vmatpush1.msra.mxu0 0.0
    %1918 = vmatprep.subr.mxu0 0.0
    %1919 = vmatpush1.msra.mxu0 0.0
    %1920 = vmatprep.mubr.f32.mxu0 0.0
    %v1921 = vand.u32 %v1627, 4294901760
    %v1922 = vsub.f32 %v1627, %v1921
    %v1923 = vand.u32 %v1922, 4294901760
    %1924 = vmatmul.mubr.f32.gmra.mrb[0].mxu0 %v1923
    %v1925 = vpop.f32.mrb[0].mxu0
    %v1926 = vadd.f32 %v1852, %v1925
    %v1927 = vpop.f32.mrb[0].mxu0
    %1928 = vdwg.mxu0
    %1929 = vmatprep.subr.mxu0 0.0
    %v1930 = vand.u32 %v1618, 4294901760
    %v1931 = vsub.f32 %v1618, %v1930
    %v1932 = vand.u32 %v1931, 4294901760
    %1933 = vmatpush1.msra.mxu0 %v1932
    %1934 = vmatprep.subr.mxu0 0.0
    %1935 = vmatpush1.msra.mxu0 0.0
    %1936 = vmatprep.subr.mxu0 0.0
    %1937 = vmatpush1.msra.mxu0 0.0
    %1938 = vmatprep.subr.mxu0 0.0
    %1939 = vmatpush1.msra.mxu0 0.0
    %1940 = vmatprep.subr.mxu0 0.0
    %1941 = vmatpush1.msra.mxu0 0.0
    %1942 = vmatprep.subr.mxu0 0.0
    %1943 = vmatpush1.msra.mxu0 0.0
    %1944 = vmatprep.subr.mxu0 0.0
    %1945 = vmatpush1.msra.mxu0 0.0
    %1946 = vmatprep.subr.mxu0 0.0
    %1947 = vmatpush1.msra.mxu0 0.0
    %1948 = vmatprep.subr.mxu0 0.0
    %1949 = vmatpush1.msra.mxu0 0.0
    %1950 = vmatprep.subr.mxu0 0.0
    %1951 = vmatpush1.msra.mxu0 0.0
    %1952 = vmatprep.subr.mxu0 0.0
    %1953 = vmatpush1.msra.mxu0 0.0
    %1954 = vmatprep.subr.mxu0 0.0
    %1955 = vmatpush1.msra.mxu0 0.0
    %1956 = vmatprep.subr.mxu0 0.0
    %1957 = vmatpush1.msra.mxu0 0.0
    %1958 = vmatprep.subr.mxu0 0.0
    %1959 = vmatpush1.msra.mxu0 0.0
    %1960 = vmatprep.subr.mxu0 0.0
    %1961 = vmatpush1.msra.mxu0 0.0
    %1962 = vmatprep.subr.mxu0 0.0
    %1963 = vmatpush1.msra.mxu0 0.0
    %1964 = vmatprep.subr.mxu0 0.0
    %1965 = vmatpush1.msra.mxu0 0.0
    %1966 = vmatprep.subr.mxu0 0.0
    %1967 = vmatpush1.msra.mxu0 0.0
    %1968 = vmatprep.subr.mxu0 0.0
    %1969 = vmatpush1.msra.mxu0 0.0
    %1970 = vmatprep.subr.mxu0 0.0
    %1971 = vmatpush1.msra.mxu0 0.0
    %1972 = vmatprep.subr.mxu0 0.0
    %1973 = vmatpush1.msra.mxu0 0.0
    %1974 = vmatprep.subr.mxu0 0.0
    %1975 = vmatpush1.msra.mxu0 0.0
    %1976 = vmatprep.subr.mxu0 0.0
    %1977 = vmatpush1.msra.mxu0 0.0
    %1978 = vmatprep.subr.mxu0 0.0
    %1979 = vmatpush1.msra.mxu0 0.0
    %1980 = vmatprep.subr.mxu0 0.0
    %1981 = vmatpush1.msra.mxu0 0.0
    %1982 = vmatprep.subr.mxu0 0.0
    %1983 = vmatpush1.msra.mxu0 0.0
    %1984 = vmatprep.subr.mxu0 0.0
    %1985 = vmatpush1.msra.mxu0 0.0
    %1986 = vmatprep.subr.mxu0 0.0
    %1987 = vmatpush1.msra.mxu0 0.0
    %1988 = vmatprep.subr.mxu0 0.0
    %1989 = vmatpush1.msra.mxu0 0.0
    %1990 = vmatprep.subr.mxu0 0.0
    %1991 = vmatpush1.msra.mxu0 0.0
    %1992 = vmatprep.subr.mxu0 0.0
    %1993 = vmatpush1.msra.mxu0 0.0
    %1994 = vmatprep.subr.mxu0 0.0
    %1995 = vmatpush1.msra.mxu0 0.0
    %1996 = vmatprep.mubr.f32.mxu0 0.0
    %v1997 = vand.u32 %v1627, 4294901760
    %1998 = vmatmul.mubr.f32.gmra.mrb[0].mxu0 %v1997
    %v1999 = vpop.f32.mrb[0].mxu0
    %v2000 = vadd.f32 %v1926, %v1999
    %v2001 = vpop.f32.mrb[0].mxu0
    %2002 = vdwg.mxu0
    %2003 = vmatprep.subr.mxu0 0.0
    %v2004 = vand.u32 %v1618, 4294901760
    %2005 = vmatpush1.msra.mxu0 %v2004
    %2006 = vmatprep.subr.mxu0 0.0
    %2007 = vmatpush1.msra.mxu0 0.0
    %2008 = vmatprep.subr.mxu0 0.0
    %2009 = vmatpush1.msra.mxu0 0.0
    %2010 = vmatprep.subr.mxu0 0.0
    %2011 = vmatpush1.msra.mxu0 0.0
    %2012 = vmatprep.subr.mxu0 0.0
    %2013 = vmatpush1.msra.mxu0 0.0
    %2014 = vmatprep.subr.mxu0 0.0
    %2015 = vmatpush1.msra.mxu0 0.0
    %2016 = vmatprep.subr.mxu0 0.0
    %2017 = vmatpush1.msra.mxu0 0.0
    %2018 = vmatprep.subr.mxu0 0.0
    %2019 = vmatpush1.msra.mxu0 0.0
    %2020 = vmatprep.subr.mxu0 0.0
    %2021 = vmatpush1.msra.mxu0 0.0
    %2022 = vmatprep.subr.mxu0 0.0
    %2023 = vmatpush1.msra.mxu0 0.0
    %2024 = vmatprep.subr.mxu0 0.0
    %2025 = vmatpush1.msra.mxu0 0.0
    %2026 = vmatprep.subr.mxu0 0.0
    %2027 = vmatpush1.msra.mxu0 0.0
    %2028 = vmatprep.subr.mxu0 0.0
    %2029 = vmatpush1.msra.mxu0 0.0
    %2030 = vmatprep.subr.mxu0 0.0
    %2031 = vmatpush1.msra.mxu0 0.0
    %2032 = vmatprep.subr.mxu0 0.0
    %2033 = vmatpush1.msra.mxu0 0.0
    %2034 = vmatprep.subr.mxu0 0.0
    %2035 = vmatpush1.msra.mxu0 0.0
    %2036 = vmatprep.subr.mxu0 0.0
    %2037 = vmatpush1.msra.mxu0 0.0
    %2038 = vmatprep.subr.mxu0 0.0
    %2039 = vmatpush1.msra.mxu0 0.0
    %2040 = vmatprep.subr.mxu0 0.0
    %2041 = vmatpush1.msra.mxu0 0.0
    %2042 = vmatprep.subr.mxu0 0.0
    %2043 = vmatpush1.msra.mxu0 0.0
    %2044 = vmatprep.subr.mxu0 0.0
    %2045 = vmatpush1.msra.mxu0 0.0
    %2046 = vmatprep.subr.mxu0 0.0
    %2047 = vmatpush1.msra.mxu0 0.0
    %2048 = vmatprep.subr.mxu0 0.0
    %2049 = vmatpush1.msra.mxu0 0.0
    %2050 = vmatprep.subr.mxu0 0.0
    %2051 = vmatpush1.msra.mxu0 0.0
    %2052 = vmatprep.subr.mxu0 0.0
    %2053 = vmatpush1.msra.mxu0 0.0
    %2054 = vmatprep.subr.mxu0 0.0
    %2055 = vmatpush1.msra.mxu0 0.0
    %2056 = vmatprep.subr.mxu0 0.0
    %2057 = vmatpush1.msra.mxu0 0.0
    %2058 = vmatprep.subr.mxu0 0.0
    %2059 = vmatpush1.msra.mxu0 0.0
    %2060 = vmatprep.subr.mxu0 0.0
    %2061 = vmatpush1.msra.mxu0 0.0
    %2062 = vmatprep.subr.mxu0 0.0
    %2063 = vmatpush1.msra.mxu0 0.0
    %2064 = vmatprep.subr.mxu0 0.0
    %2065 = vmatpush1.msra.mxu0 0.0
    %2066 = vmatprep.subr.mxu0 0.0
    %2067 = vmatpush1.msra.mxu0 0.0
    %2068 = vmatprep.mubr.f32.mxu0 0.0
    %v2069 = vand.u32 %v1627, 4294901760
    %2070 = vmatmul.mubr.f32.gmra.mrb[0].mxu0 %v2069
    %v2071 = vpop.f32.mrb[0].mxu0
    %v2072 = vadd.f32 %v2000, %v2071
    %v2073 = vpop.f32.mrb[0].mxu0
    %2074 = vdwg.mxu0
    %v2075 = vmax.f32 %v2072, 0.0
    %vm2076 = vcmask 80896
    %2077 = vst.msk [vmem:[#allocation5] sm:$0xff] %vm2076, %v2075
    // Predicated region
    $region42: #{tpu_custom_call.1} parent=1 // pred_check
      _
    $region43: #{tpu_custom_call.1} parent=1 // pred_check_branch
      %2079 = sbr.rel (0) target = $region45
    $region44: #{tpu_custom_call.1} parent=1 // pred_region
      %s2081 = ssub.s32 128, 128
      %2082 = vsyncadd [#allocation4], %s2081
      %s2084 = sshll.u32 [#allocation5], 4
      %s2085 = int_to_ptr.vmem [resolvable:$true] %s2084
      %2087 = dma.vmem_to_hbm [thread:$0]  %s2085, 128, %s9, [#allocation4]
    $region45: #{tpu_custom_call.1} parent=1 // pred_fallthru
      _
    // Predicated region
    $region46: #{tpu_custom_call.1} parent=1 // pred_check
      _
    $region47: #{tpu_custom_call.1} parent=1 // pred_check_branch
      %2089 = sbr.rel (0) target = $region49
    $region48: #{tpu_custom_call.1} parent=1 // pred_region
      %2090 = dma.done [#allocation4], 128
    $region49: #{tpu_custom_call.1} parent=1 // pred_fallthru
      _
    %2091 = vsyncpa [#allocation3], 1
    %2092 = vsyncpa [#allocation4], 1

</llo_original>
